<compile_context>
chip_gen: v6e
topology: v6e:2x2x1
jax: 0.10.0
libtpu: 0.0.40
codegen_flags: <defaults>
</compile_context>

<pallas_src>
import functools

import jax
import jax.numpy as jnp
from jax.experimental import pallas as pl
from jax.experimental.pallas import tpu as pltpu


def _fused_ensemble_mlp_kernel(state_ref, action_ref,
                               w1s_ref, w1a_ref, b1_ref,
                               w2_ref, b2_ref,
                               w3_ref, b3_ref,
                               out_ref):
    # state_ref : (B, S)          action_ref: (B, A)
    # w1s_ref   : (S, E*H)        w1a_ref   : (A, E*H)      b1_ref: (1, E*H)
    # w2_ref    : (E, H, H)       b2_ref    : (E, 1, H)
    # w3_ref    : (E, H, P)       b3_ref    : (E, 1, P)     (P = D_out padded to 128)
    # out_ref   : (E, B, P)  lane-dense (P multiple of 128 -> unmasked stores)
    E, H, _ = w2_ref.shape

    # Layer 1: one packed matmul across all ensemble members (no redundancy,
    # the input x is shared). Fused concat: x @ W1 == state @ W1_s + action @ W1_a.
    h1 = (jnp.dot(state_ref[...], w1s_ref[...], preferred_element_type=jnp.float32)
          + jnp.dot(action_ref[...], w1a_ref[...], preferred_element_type=jnp.float32)
          + b1_ref[...])
    h1 = jnp.maximum(h1, 0.0)                                  # ReLU, (B, E*H)

    # Layers 2/3: per-member matmuls (statically unrolled over E; avoids the
    # E^2 MXU/VMEM cost of block-diagonal packing).
    for e in range(E):
        h1_e = h1[:, e * H:(e + 1) * H]                        # (B, H)
        h2_e = jnp.dot(h1_e, w2_ref[e], preferred_element_type=jnp.float32) + b2_ref[e]
        h2_e = jnp.maximum(h2_e, 0.0)                          # ReLU
        out_e = jnp.dot(h2_e, w3_ref[e], preferred_element_type=jnp.float32) + b3_ref[e]
        out_ref[e, :, :] = out_e.astype(out_ref.dtype)


def pack_params(params, state_dim):
    """One-time, math-preserving weight re-layout (hoisted out of the hot path).

    params: stacked per-ensemble weights
      w1 (E, D_in, H), b1 (E, 1, H)
      w2 (E, H, H),    b2 (E, 1, H)
      w3 (E, H, D_out),b3 (E, 1, D_out)       D_out = state_dim + 1
    """
    E, D_in, H = params["w1"].shape
    D_out = params["w3"].shape[-1]
    P = ((D_out + 127) // 128) * 128           # lane-dense per-member output width

    w1c = jnp.transpose(params["w1"], (1, 0, 2)).reshape(D_in, E * H)
    return {
        "w1s": w1c[:state_dim],                                        # (S, E*H)
        "w1a": w1c[state_dim:],                                        # (A, E*H)
        "b1": jnp.transpose(params["b1"], (1, 0, 2)).reshape(1, E * H),
        "w2": params["w2"],                                            # (E, H, H)
        "b2": params["b2"],                                            # (E, 1, H)
        "w3": jnp.pad(params["w3"], ((0, 0), (0, 0), (0, P - D_out))), # (E, H, P)
        "b3": jnp.pad(params["b3"], ((0, 0), (0, 0), (0, P - D_out))), # (E, 1, P)
    }


@jax.jit
def ensemble_dynamics_forward(state, action, packed):
    """Jitted hot path: one Pallas launch + two fused output slices."""
    B, state_dim = state.shape
    _, action_dim = action.shape
    E, H, _ = packed["w2"].shape
    P = packed["w3"].shape[-1]

    out = pl.pallas_call(
        _fused_ensemble_mlp_kernel,
        out_shape=jax.ShapeDtypeStruct((E, B, P), jnp.float32),
        grid_spec=pltpu.PrefetchScalarGridSpec(
            num_scalar_prefetch=0,
            grid=(1,),
            in_specs=[
                pl.BlockSpec((B, state_dim), lambda i: (0, 0)),       # state
                pl.BlockSpec((B, action_dim), lambda i: (0, 0)),      # action
                pl.BlockSpec((state_dim, E * H), lambda i: (0, 0)),   # w1 (state rows)
                pl.BlockSpec((action_dim, E * H), lambda i: (0, 0)),  # w1 (action rows)
                pl.BlockSpec((1, E * H), lambda i: (0, 0)),           # b1
                pl.BlockSpec((E, H, H), lambda i: (0, 0, 0)),         # w2 per-member
                pl.BlockSpec((E, 1, H), lambda i: (0, 0, 0)),         # b2 per-member
                pl.BlockSpec((E, H, P), lambda i: (0, 0, 0)),         # w3 per-member (padded)
                pl.BlockSpec((E, 1, P), lambda i: (0, 0, 0)),         # b3 per-member (padded)
            ],
            out_specs=pl.BlockSpec((E, B, P), lambda i: (0, 0, 0)),
        ),
        compiler_params=pltpu.CompilerParams(
            dimension_semantics=("arbitrary",),
            vmem_limit_bytes=64 * 1024 * 1024,
        ),
    )(state, action,
      packed["w1s"], packed["w1a"], packed["b1"],
      packed["w2"], packed["b2"],
      packed["w3"], packed["b3"])

    # torch-style split: out[..., :-1], out[..., -1:]; padded cols are discarded.
    next_states = out[..., :state_dim]
    rewards = out[..., state_dim:state_dim + 1]
    return next_states, rewards


def init_params(key, state_dim, action_dim, hidden_size, num_ensembles):
    """Deterministic init mimicking nn.Linear's uniform(-1/sqrt(fan_in), 1/sqrt(fan_in))."""
    D_in = state_dim + action_dim
    D_out = state_dim + 1
    E, H = num_ensembles, hidden_size

    def lin(k, fan_in, fan_out):
        kw, kb = jax.random.split(k)
        bound = 1.0 / jnp.sqrt(fan_in)
        w = jax.random.uniform(kw, (E, fan_in, fan_out), jnp.float32, -bound, bound)
        b = jax.random.uniform(kb, (E, 1, fan_out), jnp.float32, -bound, bound)
        return w, b

    k1, k2, k3 = jax.random.split(key, 3)
    w1, b1 = lin(k1, D_in, H)
    w2, b2 = lin(k2, H, H)
    w3, b3 = lin(k3, H, D_out)
    return {"w1": w1, "b1": b1, "w2": w2, "b2": b2, "w3": w3, "b3": b3}


def _reference_forward(state, action, params):
    """Pure-JAX reference for correctness check."""
    x = jnp.concatenate([state, action], axis=-1)
    h1 = jnp.maximum(jnp.einsum("bi,eih->ebh", x, params["w1"]) + params["b1"], 0.0)
    h2 = jnp.maximum(jnp.einsum("ebh,ehk->ebk", h1, params["w2"]) + params["b2"], 0.0)
    out = jnp.einsum("ebh,ehk->ebk", h2, params["w3"]) + params["b3"]
    return out[..., :-1], out[..., -1:]


if __name__ == "__main__":
    state_dim = 16
    action_dim = 8
    hidden_size = 32
    num_ensembles = 5
    batch = 8

    key = jax.random.PRNGKey(0)
    kp, ks, ka = jax.random.split(key, 3)

    params = init_params(kp, state_dim, action_dim, hidden_size, num_ensembles)
    state = jax.random.normal(ks, (batch, state_dim), jnp.float32)
    action = jax.random.normal(ka, (batch, action_dim), jnp.float32)

    # Hot-path split: pack weights once (only when params change) ...
    packed = jax.tree_util.tree_map(jax.block_until_ready, pack_params(params, state_dim))

    # ... then the per-step forward is a single Pallas launch under jit.
    next_states, rewards = ensemble_dynamics_forward(state, action, packed)
    jax.block_until_ready(next_states)
    jax.block_until_ready(rewards)

    ref_ns, ref_r = _reference_forward(state, action, params)
    assert next_states.shape == (num_ensembles, batch, state_dim)
    assert rewards.shape == (num_ensembles, batch, 1)
    assert jnp.allclose(next_states, ref_ns, atol=1e-5, rtol=1e-5)
    assert jnp.allclose(rewards, ref_r, atol=1e-5, rtol=1e-5)

    print("KERNEL_OK")
</pallas_src>

<mosaic_0001>
module attributes {stable_mosaic.version = 11 : i64} {
  func.func @_fused_ensemble_mlp_kernel(%arg0: i32, %arg1: memref<8x16xf32, #tpu.memory_space<vmem>>, %arg2: memref<8x8xf32, #tpu.memory_space<vmem>>, %arg3: memref<16x160xf32, #tpu.memory_space<vmem>>, %arg4: memref<8x160xf32, #tpu.memory_space<vmem>>, %arg5: memref<1x160xf32, #tpu.memory_space<vmem>>, %arg6: memref<5x32x32xf32, #tpu.memory_space<vmem>>, %arg7: memref<5x1x32xf32, #tpu.memory_space<vmem>>, %arg8: memref<5x32x128xf32, #tpu.memory_space<vmem>>, %arg9: memref<5x1x128xf32, #tpu.memory_space<vmem>>, %arg10: memref<5x8x128xf32, #tpu.memory_space<vmem>>) attributes {dimension_semantics = [#tpu.dimension_semantics<arbitrary>], iteration_bounds = array<i64: 1>, scalar_prefetch = 0 : i64, scratch_operands = 0 : i64, tpu.core_type = #tpu.core_type<tc>, window_params = [{pipeline_mode = #tpu.pipeline_mode<synchronous>, transform_indices = @transform_0, window_bounds = array<i64: 8, 16>}, {pipeline_mode = #tpu.pipeline_mode<synchronous>, transform_indices = @transform_1, window_bounds = array<i64: 8, 8>}, {pipeline_mode = #tpu.pipeline_mode<synchronous>, transform_indices = @transform_2, window_bounds = array<i64: 16, 160>}, {pipeline_mode = #tpu.pipeline_mode<synchronous>, transform_indices = @transform_3, window_bounds = array<i64: 8, 160>}, {pipeline_mode = #tpu.pipeline_mode<synchronous>, transform_indices = @transform_4, window_bounds = array<i64: 1, 160>}, {pipeline_mode = #tpu.pipeline_mode<synchronous>, transform_indices = @transform_5, window_bounds = array<i64: 5, 32, 32>}, {pipeline_mode = #tpu.pipeline_mode<synchronous>, transform_indices = @transform_6, window_bounds = array<i64: 5, 1, 32>}, {pipeline_mode = #tpu.pipeline_mode<synchronous>, transform_indices = @transform_7, window_bounds = array<i64: 5, 32, 128>}, {pipeline_mode = #tpu.pipeline_mode<synchronous>, transform_indices = @transform_8, window_bounds = array<i64: 5, 1, 128>}, {pipeline_mode = #tpu.pipeline_mode<synchronous>, transform_indices = @transform_9, window_bounds = array<i64: 5, 8, 128>}]} {
    %c0 = arith.constant 0 : index
    %c0_0 = arith.constant 0 : index
    %0 = vector.load %arg1[%c0, %c0_0] : memref<8x16xf32, #tpu.memory_space<vmem>>, vector<8x16xf32>
    %c0_1 = arith.constant 0 : index
    %c0_2 = arith.constant 0 : index
    %1 = vector.load %arg3[%c0_1, %c0_2] : memref<16x160xf32, #tpu.memory_space<vmem>>, vector<16x160xf32>
    %cst = arith.constant dense<0.000000e+00> : vector<8x160xf32>
    %2 = tpu.matmul %0, %1, %cst {dimension_numbers = #tpu.dot_dimension_numbers<[1], [0], [0], [1], [0, 0, 1, 1], [], []>} : vector<8x16xf32>, vector<16x160xf32>, vector<8x160xf32> -> vector<8x160xf32>
    %c0_3 = arith.constant 0 : index
    %c0_4 = arith.constant 0 : index
    %3 = vector.load %arg2[%c0_3, %c0_4] : memref<8x8xf32, #tpu.memory_space<vmem>>, vector<8x8xf32>
    %c0_5 = arith.constant 0 : index
    %c0_6 = arith.constant 0 : index
    %4 = vector.load %arg4[%c0_5, %c0_6] : memref<8x160xf32, #tpu.memory_space<vmem>>, vector<8x160xf32>
    %cst_7 = arith.constant dense<0.000000e+00> : vector<8x160xf32>
    %5 = tpu.matmul %3, %4, %cst_7 {dimension_numbers = #tpu.dot_dimension_numbers<[1], [0], [0], [1], [0, 0, 1, 1], [], []>} : vector<8x8xf32>, vector<8x160xf32>, vector<8x160xf32> -> vector<8x160xf32>
    %6 = arith.addf %2, %5 : vector<8x160xf32>
    %c0_8 = arith.constant 0 : index
    %c0_9 = arith.constant 0 : index
    %7 = vector.load %arg5[%c0_8, %c0_9] : memref<1x160xf32, #tpu.memory_space<vmem>>, vector<1x160xf32>
    %8 = vector.broadcast %7 : vector<1x160xf32> to vector<8x160xf32>
    %9 = arith.addf %6, %8 : vector<8x160xf32>
    %cst_10 = arith.constant 0.000000e+00 : f32
    %10 = vector.broadcast %cst_10 : f32 to vector<8x160xf32>
    %11 = arith.maximumf %9, %10 : vector<8x160xf32>
    %12 = vector.extract_strided_slice %11 {offsets = [0, 0], sizes = [8, 32], strides = [1, 1]} : vector<8x160xf32> to vector<8x32xf32>
    %c0_11 = arith.constant 0 : index
    %c0_12 = arith.constant 0 : index
    %c0_13 = arith.constant 0 : index
    %13 = vector.load %arg6[%c0_11, %c0_12, %c0_13] : memref<5x32x32xf32, #tpu.memory_space<vmem>>, vector<1x32x32xf32>
    %14 = vector.shape_cast %13 : vector<1x32x32xf32> to vector<32x32xf32>
    %cst_14 = arith.constant dense<0.000000e+00> : vector<8x32xf32>
    %15 = tpu.matmul %12, %14, %cst_14 {dimension_numbers = #tpu.dot_dimension_numbers<[1], [0], [0], [1], [0, 0, 1, 1], [], []>} : vector<8x32xf32>, vector<32x32xf32>, vector<8x32xf32> -> vector<8x32xf32>
    %c0_15 = arith.constant 0 : index
    %c0_16 = arith.constant 0 : index
    %c0_17 = arith.constant 0 : index
    %16 = vector.load %arg7[%c0_15, %c0_16, %c0_17] : memref<5x1x32xf32, #tpu.memory_space<vmem>>, vector<1x1x32xf32>
    %17 = vector.shape_cast %16 : vector<1x1x32xf32> to vector<1x32xf32>
    %18 = vector.broadcast %17 : vector<1x32xf32> to vector<8x32xf32>
    %19 = arith.addf %15, %18 : vector<8x32xf32>
    %cst_18 = arith.constant 0.000000e+00 : f32
    %20 = vector.broadcast %cst_18 : f32 to vector<8x32xf32>
    %21 = arith.maximumf %19, %20 : vector<8x32xf32>
    %c0_19 = arith.constant 0 : index
    %c0_20 = arith.constant 0 : index
    %c0_21 = arith.constant 0 : index
    %22 = vector.load %arg8[%c0_19, %c0_20, %c0_21] : memref<5x32x128xf32, #tpu.memory_space<vmem>>, vector<1x32x128xf32>
    %23 = vector.shape_cast %22 : vector<1x32x128xf32> to vector<32x128xf32>
    %cst_22 = arith.constant dense<0.000000e+00> : vector<8x128xf32>
    %24 = tpu.matmul %21, %23, %cst_22 {dimension_numbers = #tpu.dot_dimension_numbers<[1], [0], [0], [1], [0, 0, 1, 1], [], []>} : vector<8x32xf32>, vector<32x128xf32>, vector<8x128xf32> -> vector<8x128xf32>
    %c0_23 = arith.constant 0 : index
    %c0_24 = arith.constant 0 : index
    %c0_25 = arith.constant 0 : index
    %25 = vector.load %arg9[%c0_23, %c0_24, %c0_25] : memref<5x1x128xf32, #tpu.memory_space<vmem>>, vector<1x1x128xf32>
    %26 = vector.shape_cast %25 : vector<1x1x128xf32> to vector<1x128xf32>
    %27 = vector.broadcast %26 : vector<1x128xf32> to vector<8x128xf32>
    %28 = arith.addf %24, %27 : vector<8x128xf32>
    %c0_26 = arith.constant 0 : index
    %c0_27 = arith.constant 0 : index
    %c0_28 = arith.constant 0 : index
    %29 = vector.load %arg10[%c0_26, %c0_27, %c0_28] : memref<5x8x128xf32, #tpu.memory_space<vmem>>, vector<1x8x128xf32>
    %30 = vector.shape_cast %29 : vector<1x8x128xf32> to vector<8x128xf32>
    %31 = vector.shape_cast %28 : vector<8x128xf32> to vector<1x8x128xf32>
    tpu.vector_store %arg10[%c0_26, %c0_27, %c0_28], %31 {strides = array<i32>} : memref<5x8x128xf32, #tpu.memory_space<vmem>>, vector<1x8x128xf32>,
    %32 = vector.extract_strided_slice %11 {offsets = [0, 32], sizes = [8, 32], strides = [1, 1]} : vector<8x160xf32> to vector<8x32xf32>
    %c1 = arith.constant 1 : index
    %c0_29 = arith.constant 0 : index
    %c0_30 = arith.constant 0 : index
    %33 = vector.load %arg6[%c1, %c0_29, %c0_30] : memref<5x32x32xf32, #tpu.memory_space<vmem>>, vector<1x32x32xf32>
    %34 = vector.shape_cast %33 : vector<1x32x32xf32> to vector<32x32xf32>
    %cst_31 = arith.constant dense<0.000000e+00> : vector<8x32xf32>
    %35 = tpu.matmul %32, %34, %cst_31 {dimension_numbers = #tpu.dot_dimension_numbers<[1], [0], [0], [1], [0, 0, 1, 1], [], []>} : vector<8x32xf32>, vector<32x32xf32>, vector<8x32xf32> -> vector<8x32xf32>
    %c1_32 = arith.constant 1 : index
    %c0_33 = arith.constant 0 : index
    %c0_34 = arith.constant 0 : index
    %36 = vector.load %arg7[%c1_32, %c0_33, %c0_34] : memref<5x1x32xf32, #tpu.memory_space<vmem>>, vector<1x1x32xf32>
    %37 = vector.shape_cast %36 : vector<1x1x32xf32> to vector<1x32xf32>
    %38 = vector.broadcast %37 : vector<1x32xf32> to vector<8x32xf32>
    %39 = arith.addf %35, %38 : vector<8x32xf32>
    %cst_35 = arith.constant 0.000000e+00 : f32
    %40 = vector.broadcast %cst_35 : f32 to vector<8x32xf32>
    %41 = arith.maximumf %39, %40 : vector<8x32xf32>
    %c1_36 = arith.constant 1 : index
    %c0_37 = arith.constant 0 : index
    %c0_38 = arith.constant 0 : index
    %42 = vector.load %arg8[%c1_36, %c0_37, %c0_38] : memref<5x32x128xf32, #tpu.memory_space<vmem>>, vector<1x32x128xf32>
    %43 = vector.shape_cast %42 : vector<1x32x128xf32> to vector<32x128xf32>
    %cst_39 = arith.constant dense<0.000000e+00> : vector<8x128xf32>
    %44 = tpu.matmul %41, %43, %cst_39 {dimension_numbers = #tpu.dot_dimension_numbers<[1], [0], [0], [1], [0, 0, 1, 1], [], []>} : vector<8x32xf32>, vector<32x128xf32>, vector<8x128xf32> -> vector<8x128xf32>
    %c1_40 = arith.constant 1 : index
    %c0_41 = arith.constant 0 : index
    %c0_42 = arith.constant 0 : index
    %45 = vector.load %arg9[%c1_40, %c0_41, %c0_42] : memref<5x1x128xf32, #tpu.memory_space<vmem>>, vector<1x1x128xf32>
    %46 = vector.shape_cast %45 : vector<1x1x128xf32> to vector<1x128xf32>
    %47 = vector.broadcast %46 : vector<1x128xf32> to vector<8x128xf32>
    %48 = arith.addf %44, %47 : vector<8x128xf32>
    %c1_43 = arith.constant 1 : index
    %c0_44 = arith.constant 0 : index
    %c0_45 = arith.constant 0 : index
    %49 = vector.load %arg10[%c1_43, %c0_44, %c0_45] : memref<5x8x128xf32, #tpu.memory_space<vmem>>, vector<1x8x128xf32>
    %50 = vector.shape_cast %49 : vector<1x8x128xf32> to vector<8x128xf32>
    %51 = vector.shape_cast %48 : vector<8x128xf32> to vector<1x8x128xf32>
    tpu.vector_store %arg10[%c1_43, %c0_44, %c0_45], %51 {strides = array<i32>} : memref<5x8x128xf32, #tpu.memory_space<vmem>>, vector<1x8x128xf32>,
    %52 = vector.extract_strided_slice %11 {offsets = [0, 64], sizes = [8, 32], strides = [1, 1]} : vector<8x160xf32> to vector<8x32xf32>
    %c2 = arith.constant 2 : index
    %c0_46 = arith.constant 0 : index
    %c0_47 = arith.constant 0 : index
    %53 = vector.load %arg6[%c2, %c0_46, %c0_47] : memref<5x32x32xf32, #tpu.memory_space<vmem>>, vector<1x32x32xf32>
    %54 = vector.shape_cast %53 : vector<1x32x32xf32> to vector<32x32xf32>
    %cst_48 = arith.constant dense<0.000000e+00> : vector<8x32xf32>
    %55 = tpu.matmul %52, %54, %cst_48 {dimension_numbers = #tpu.dot_dimension_numbers<[1], [0], [0], [1], [0, 0, 1, 1], [], []>} : vector<8x32xf32>, vector<32x32xf32>, vector<8x32xf32> -> vector<8x32xf32>
    %c2_49 = arith.constant 2 : index
    %c0_50 = arith.constant 0 : index
    %c0_51 = arith.constant 0 : index
    %56 = vector.load %arg7[%c2_49, %c0_50, %c0_51] : memref<5x1x32xf32, #tpu.memory_space<vmem>>, vector<1x1x32xf32>
    %57 = vector.shape_cast %56 : vector<1x1x32xf32> to vector<1x32xf32>
    %58 = vector.broadcast %57 : vector<1x32xf32> to vector<8x32xf32>
    %59 = arith.addf %55, %58 : vector<8x32xf32>
    %cst_52 = arith.constant 0.000000e+00 : f32
    %60 = vector.broadcast %cst_52 : f32 to vector<8x32xf32>
    %61 = arith.maximumf %59, %60 : vector<8x32xf32>
    %c2_53 = arith.constant 2 : index
    %c0_54 = arith.constant 0 : index
    %c0_55 = arith.constant 0 : index
    %62 = vector.load %arg8[%c2_53, %c0_54, %c0_55] : memref<5x32x128xf32, #tpu.memory_space<vmem>>, vector<1x32x128xf32>
    %63 = vector.shape_cast %62 : vector<1x32x128xf32> to vector<32x128xf32>
    %cst_56 = arith.constant dense<0.000000e+00> : vector<8x128xf32>
    %64 = tpu.matmul %61, %63, %cst_56 {dimension_numbers = #tpu.dot_dimension_numbers<[1], [0], [0], [1], [0, 0, 1, 1], [], []>} : vector<8x32xf32>, vector<32x128xf32>, vector<8x128xf32> -> vector<8x128xf32>
    %c2_57 = arith.constant 2 : index
    %c0_58 = arith.constant 0 : index
    %c0_59 = arith.constant 0 : index
    %65 = vector.load %arg9[%c2_57, %c0_58, %c0_59] : memref<5x1x128xf32, #tpu.memory_space<vmem>>, vector<1x1x128xf32>
    %66 = vector.shape_cast %65 : vector<1x1x128xf32> to vector<1x128xf32>
    %67 = vector.broadcast %66 : vector<1x128xf32> to vector<8x128xf32>
    %68 = arith.addf %64, %67 : vector<8x128xf32>
    %c2_60 = arith.constant 2 : index
    %c0_61 = arith.constant 0 : index
    %c0_62 = arith.constant 0 : index
    %69 = vector.load %arg10[%c2_60, %c0_61, %c0_62] : memref<5x8x128xf32, #tpu.memory_space<vmem>>, vector<1x8x128xf32>
    %70 = vector.shape_cast %69 : vector<1x8x128xf32> to vector<8x128xf32>
    %71 = vector.shape_cast %68 : vector<8x128xf32> to vector<1x8x128xf32>
    tpu.vector_store %arg10[%c2_60, %c0_61, %c0_62], %71 {strides = array<i32>} : memref<5x8x128xf32, #tpu.memory_space<vmem>>, vector<1x8x128xf32>,
    %72 = vector.extract_strided_slice %11 {offsets = [0, 96], sizes = [8, 32], strides = [1, 1]} : vector<8x160xf32> to vector<8x32xf32>
    %c3 = arith.constant 3 : index
    %c0_63 = arith.constant 0 : index
    %c0_64 = arith.constant 0 : index
    %73 = vector.load %arg6[%c3, %c0_63, %c0_64] : memref<5x32x32xf32, #tpu.memory_space<vmem>>, vector<1x32x32xf32>
    %74 = vector.shape_cast %73 : vector<1x32x32xf32> to vector<32x32xf32>
    %cst_65 = arith.constant dense<0.000000e+00> : vector<8x32xf32>
    %75 = tpu.matmul %72, %74, %cst_65 {dimension_numbers = #tpu.dot_dimension_numbers<[1], [0], [0], [1], [0, 0, 1, 1], [], []>} : vector<8x32xf32>, vector<32x32xf32>, vector<8x32xf32> -> vector<8x32xf32>
    %c3_66 = arith.constant 3 : index
    %c0_67 = arith.constant 0 : index
    %c0_68 = arith.constant 0 : index
    %76 = vector.load %arg7[%c3_66, %c0_67, %c0_68] : memref<5x1x32xf32, #tpu.memory_space<vmem>>, vector<1x1x32xf32>
    %77 = vector.shape_cast %76 : vector<1x1x32xf32> to vector<1x32xf32>
    %78 = vector.broadcast %77 : vector<1x32xf32> to vector<8x32xf32>
    %79 = arith.addf %75, %78 : vector<8x32xf32>
    %cst_69 = arith.constant 0.000000e+00 : f32
    %80 = vector.broadcast %cst_69 : f32 to vector<8x32xf32>
    %81 = arith.maximumf %79, %80 : vector<8x32xf32>
    %c3_70 = arith.constant 3 : index
    %c0_71 = arith.constant 0 : index
    %c0_72 = arith.constant 0 : index
    %82 = vector.load %arg8[%c3_70, %c0_71, %c0_72] : memref<5x32x128xf32, #tpu.memory_space<vmem>>, vector<1x32x128xf32>
    %83 = vector.shape_cast %82 : vector<1x32x128xf32> to vector<32x128xf32>
    %cst_73 = arith.constant dense<0.000000e+00> : vector<8x128xf32>
    %84 = tpu.matmul %81, %83, %cst_73 {dimension_numbers = #tpu.dot_dimension_numbers<[1], [0], [0], [1], [0, 0, 1, 1], [], []>} : vector<8x32xf32>, vector<32x128xf32>, vector<8x128xf32> -> vector<8x128xf32>
    %c3_74 = arith.constant 3 : index
    %c0_75 = arith.constant 0 : index
    %c0_76 = arith.constant 0 : index
    %85 = vector.load %arg9[%c3_74, %c0_75, %c0_76] : memref<5x1x128xf32, #tpu.memory_space<vmem>>, vector<1x1x128xf32>
    %86 = vector.shape_cast %85 : vector<1x1x128xf32> to vector<1x128xf32>
    %87 = vector.broadcast %86 : vector<1x128xf32> to vector<8x128xf32>
    %88 = arith.addf %84, %87 : vector<8x128xf32>
    %c3_77 = arith.constant 3 : index
    %c0_78 = arith.constant 0 : index
    %c0_79 = arith.constant 0 : index
    %89 = vector.load %arg10[%c3_77, %c0_78, %c0_79] : memref<5x8x128xf32, #tpu.memory_space<vmem>>, vector<1x8x128xf32>
    %90 = vector.shape_cast %89 : vector<1x8x128xf32> to vector<8x128xf32>
    %91 = vector.shape_cast %88 : vector<8x128xf32> to vector<1x8x128xf32>
    tpu.vector_store %arg10[%c3_77, %c0_78, %c0_79], %91 {strides = array<i32>} : memref<5x8x128xf32, #tpu.memory_space<vmem>>, vector<1x8x128xf32>,
    %92 = vector.extract_strided_slice %11 {offsets = [0, 128], sizes = [8, 32], strides = [1, 1]} : vector<8x160xf32> to vector<8x32xf32>
    %c4 = arith.constant 4 : index
    %c0_80 = arith.constant 0 : index
    %c0_81 = arith.constant 0 : index
    %93 = vector.load %arg6[%c4, %c0_80, %c0_81] : memref<5x32x32xf32, #tpu.memory_space<vmem>>, vector<1x32x32xf32>
    %94 = vector.shape_cast %93 : vector<1x32x32xf32> to vector<32x32xf32>
    %cst_82 = arith.constant dense<0.000000e+00> : vector<8x32xf32>
    %95 = tpu.matmul %92, %94, %cst_82 {dimension_numbers = #tpu.dot_dimension_numbers<[1], [0], [0], [1], [0, 0, 1, 1], [], []>} : vector<8x32xf32>, vector<32x32xf32>, vector<8x32xf32> -> vector<8x32xf32>
    %c4_83 = arith.constant 4 : index
    %c0_84 = arith.constant 0 : index
    %c0_85 = arith.constant 0 : index
    %96 = vector.load %arg7[%c4_83, %c0_84, %c0_85] : memref<5x1x32xf32, #tpu.memory_space<vmem>>, vector<1x1x32xf32>
    %97 = vector.shape_cast %96 : vector<1x1x32xf32> to vector<1x32xf32>
    %98 = vector.broadcast %97 : vector<1x32xf32> to vector<8x32xf32>
    %99 = arith.addf %95, %98 : vector<8x32xf32>
    %cst_86 = arith.constant 0.000000e+00 : f32
    %100 = vector.broadcast %cst_86 : f32 to vector<8x32xf32>
    %101 = arith.maximumf %99, %100 : vector<8x32xf32>
    %c4_87 = arith.constant 4 : index
    %c0_88 = arith.constant 0 : index
    %c0_89 = arith.constant 0 : index
    %102 = vector.load %arg8[%c4_87, %c0_88, %c0_89] : memref<5x32x128xf32, #tpu.memory_space<vmem>>, vector<1x32x128xf32>
    %103 = vector.shape_cast %102 : vector<1x32x128xf32> to vector<32x128xf32>
    %cst_90 = arith.constant dense<0.000000e+00> : vector<8x128xf32>
    %104 = tpu.matmul %101, %103, %cst_90 {dimension_numbers = #tpu.dot_dimension_numbers<[1], [0], [0], [1], [0, 0, 1, 1], [], []>} : vector<8x32xf32>, vector<32x128xf32>, vector<8x128xf32> -> vector<8x128xf32>
    %c4_91 = arith.constant 4 : index
    %c0_92 = arith.constant 0 : index
    %c0_93 = arith.constant 0 : index
    %105 = vector.load %arg9[%c4_91, %c0_92, %c0_93] : memref<5x1x128xf32, #tpu.memory_space<vmem>>, vector<1x1x128xf32>
    %106 = vector.shape_cast %105 : vector<1x1x128xf32> to vector<1x128xf32>
    %107 = vector.broadcast %106 : vector<1x128xf32> to vector<8x128xf32>
    %108 = arith.addf %104, %107 : vector<8x128xf32>
    %c4_94 = arith.constant 4 : index
    %c0_95 = arith.constant 0 : index
    %c0_96 = arith.constant 0 : index
    %109 = vector.load %arg10[%c4_94, %c0_95, %c0_96] : memref<5x8x128xf32, #tpu.memory_space<vmem>>, vector<1x8x128xf32>
    %110 = vector.shape_cast %109 : vector<1x8x128xf32> to vector<8x128xf32>
    %111 = vector.shape_cast %108 : vector<8x128xf32> to vector<1x8x128xf32>
    tpu.vector_store %arg10[%c4_94, %c0_95, %c0_96], %111 {strides = array<i32>} : memref<5x8x128xf32, #tpu.memory_space<vmem>>, vector<1x8x128xf32>,
    return
  }
  func.func @transform_0(%arg0: i32) -> (i32, i32) {
    %c0_i32 = arith.constant 0 : i32
    %c0_i32_0 = arith.constant 0 : i32
    %c0_i32_1 = arith.constant 0 : i32
    return %c0_i32, %c0_i32_0 : i32, i32
  }
  func.func @transform_1(%arg0: i32) -> (i32, i32) {
    %c0_i32 = arith.constant 0 : i32
    %c0_i32_0 = arith.constant 0 : i32
    %c0_i32_1 = arith.constant 0 : i32
    return %c0_i32, %c0_i32_0 : i32, i32
  }
  func.func @transform_2(%arg0: i32) -> (i32, i32) {
    %c0_i32 = arith.constant 0 : i32
    %c0_i32_0 = arith.constant 0 : i32
    %c0_i32_1 = arith.constant 0 : i32
    return %c0_i32, %c0_i32_0 : i32, i32
  }
  func.func @transform_3(%arg0: i32) -> (i32, i32) {
    %c0_i32 = arith.constant 0 : i32
    %c0_i32_0 = arith.constant 0 : i32
    %c0_i32_1 = arith.constant 0 : i32
    return %c0_i32, %c0_i32_0 : i32, i32
  }
  func.func @transform_4(%arg0: i32) -> (i32, i32) {
    %c0_i32 = arith.constant 0 : i32
    %c0_i32_0 = arith.constant 0 : i32
    %c0_i32_1 = arith.constant 0 : i32
    return %c0_i32, %c0_i32_0 : i32, i32
  }
  func.func @transform_5(%arg0: i32) -> (i32, i32, i32) {
    %c0_i32 = arith.constant 0 : i32
    %c0_i32_0 = arith.constant 0 : i32
    %c0_i32_1 = arith.constant 0 : i32
    %c0_i32_2 = arith.constant 0 : i32
    return %c0_i32, %c0_i32_0, %c0_i32_1 : i32, i32, i32
  }
  func.func @transform_6(%arg0: i32) -> (i32, i32, i32) {
    %c0_i32 = arith.constant 0 : i32
    %c0_i32_0 = arith.constant 0 : i32
    %c0_i32_1 = arith.constant 0 : i32
    %c0_i32_2 = arith.constant 0 : i32
    return %c0_i32, %c0_i32_0, %c0_i32_1 : i32, i32, i32
  }
  func.func @transform_7(%arg0: i32) -> (i32, i32, i32) {
    %c0_i32 = arith.constant 0 : i32
    %c0_i32_0 = arith.constant 0 : i32
    %c0_i32_1 = arith.constant 0 : i32
    %c0_i32_2 = arith.constant 0 : i32
    return %c0_i32, %c0_i32_0, %c0_i32_1 : i32, i32, i32
  }
  func.func @transform_8(%arg0: i32) -> (i32, i32, i32) {
    %c0_i32 = arith.constant 0 : i32
    %c0_i32_0 = arith.constant 0 : i32
    %c0_i32_1 = arith.constant 0 : i32
    %c0_i32_2 = arith.constant 0 : i32
    return %c0_i32, %c0_i32_0, %c0_i32_1 : i32, i32, i32
  }
  func.func @transform_9(%arg0: i32) -> (i32, i32, i32) {
    %c0_i32 = arith.constant 0 : i32
    %c0_i32_0 = arith.constant 0 : i32
    %c0_i32_1 = arith.constant 0 : i32
    %c0_i32_2 = arith.constant 0 : i32
    return %c0_i32, %c0_i32_0, %c0_i32_1 : i32, i32, i32
  }
}

</mosaic_0001>

<llo_original>
// kernel: ensemble_dynamics_forward.1
$region0: #{ensemble_dynamics_forward.1}
  #allocation0 [shape = 'u32[]', space=smem, size = 0x4, offset = 0x4, fixed_abs, tag = 'smem constant byte address 0x4 - core index']
  #allocation1 [shape = 'u32[144,128]{1,0:T(1,128)}', space=vmem, size = 0x12000, scoped, tag = 'internal scratch']
  %s0 = inlined_call_operand.hbm [shape: f32[8,16], index: 0, kind: input, shape index: {}]
  %s1 = inlined_call_operand.hbm [shape: f32[8,8], index: 1, kind: input, shape index: {}]
  %s2 = inlined_call_operand.hbm [shape: f32[16,160], index: 2, kind: input, shape index: {}]
  %s3 = inlined_call_operand.hbm [shape: f32[8,160], index: 3, kind: input, shape index: {}]
  %s4 = inlined_call_operand.hbm [shape: f32[1,160], index: 4, kind: input, shape index: {}]
  %s5 = inlined_call_operand.hbm [shape: f32[5,32,32], index: 5, kind: input, shape index: {}]
  %s6 = inlined_call_operand.vmem [shape: f32[5,1,32], index: 6, kind: input, shape index: {}]
  %s7 = inlined_call_operand.hbm [shape: f32[5,32,128], index: 7, kind: input, shape index: {}]
  %s8 = inlined_call_operand.hbm [shape: f32[5,1,128], index: 8, kind: input, shape index: {}]
  %s9 = inlined_call_operand.vmem [shape: f32[5,8,128], index: 9, kind: output, shape index: {}]
  %s10 = sld [smem:[#allocation0]]
  $region78: #{ensemble_dynamics_forward.1} parent=0
    _
  %s12 = ssub.s32 1, %s10
  %s13 = scalar_select 0, %s12, %s10
  $region1: #{ensemble_dynamics_forward.1} parent=0
    #allocation2 [shape = 'u8[4096]{0}', space=vmem, size = 0x1000, scoped, tag = 'input window, operand 0, single buffered']
    #allocation3 [shape = 's32[1]{0}', space=sflag, size = 0x4, scoped, tag = 'scoped memory for ensemble_dynamics_forward.1']
    #allocation4 [shape = 'u8[4096]{0}', space=vmem, size = 0x1000, scoped, tag = 'input window, operand 1, single buffered']
    #allocation5 [shape = 's32[1]{0}', space=sflag, size = 0x4, scoped, tag = 'scoped memory for ensemble_dynamics_forward.1']
    #allocation6 [shape = 'u8[16384]{0}', space=vmem, size = 0x4000, scoped, tag = 'input window, operand 2, single buffered']
    #allocation7 [shape = 'u8[8192]{0}', space=vmem, size = 0x2000, scoped, tag = 'input window, operand 3, single buffered']
    #allocation8 [shape = 's32[1]{0}', space=sflag, size = 0x4, scoped, tag = 'scoped memory for ensemble_dynamics_forward.1']
    #allocation9 [shape = 'u8[1024]{0}', space=vmem, size = 0x400, scoped, tag = 'input window, operand 4, single buffered']
    #allocation10 [shape = 'u8[81920]{0}', space=vmem, size = 0x14000, scoped, tag = 'input window, operand 5, single buffered']
    #allocation11 [shape = 's32[1]{0}', space=sflag, size = 0x4, scoped, tag = 'scoped memory for ensemble_dynamics_forward.1']
    #allocation12 [shape = 'u8[81920]{0}', space=vmem, size = 0x14000, scoped, tag = 'input window, operand 7, single buffered']
    #allocation13 [shape = 'u8[2560]{0}', space=vmem, size = 0xc00, scoped, tag = 'input window, operand 8, single buffered']
    #allocation14 [shape = 's32[1]{0}', space=sflag, size = 0x4, scoped, tag = 'scoped memory for ensemble_dynamics_forward.1']
    %14 = vsyncpa [#allocation3], 0
    %15 = vsyncpa [#allocation5], 0
    %16 = vsyncpa [#allocation8], 0
    %17 = vsyncpa [#allocation11], 0
    %18 = vsyncpa [#allocation14], 0
    // Predicated region
    $region2: #{ensemble_dynamics_forward.1} parent=1 // pred_check
      _
    $region3: #{ensemble_dynamics_forward.1} parent=1 // pred_check_branch
      %20 = sbr.rel (0) target = $region5
    $region4: #{ensemble_dynamics_forward.1} parent=1 // pred_region
      %s22 = ssub.s32 128, 128
      %23 = vsyncadd [#allocation3], %s22
      %s25 = sshll.u32 [#allocation2], 4
      %s26 = int_to_ptr.vmem [resolvable:$true] %s25
      %28 = dma.hbm_to_vmem [thread:$0]  %s0, 128, %s26, [#allocation3]
    $region5: #{ensemble_dynamics_forward.1} parent=1 // pred_fallthru
      _
    // Predicated region
    $region6: #{ensemble_dynamics_forward.1} parent=1 // pred_check
      _
    $region7: #{ensemble_dynamics_forward.1} parent=1 // pred_check_branch
      %30 = sbr.rel (0) target = $region9
    $region8: #{ensemble_dynamics_forward.1} parent=1 // pred_region
      %s32 = ssub.s32 128, 128
      %33 = vsyncadd [#allocation5], %s32
      %s35 = sshll.u32 [#allocation4], 4
      %s36 = int_to_ptr.vmem [resolvable:$true] %s35
      %38 = dma.hbm_to_vmem [thread:$0]  %s1, 128, %s36, [#allocation5]
    $region9: #{ensemble_dynamics_forward.1} parent=1 // pred_fallthru
      _
    // Predicated region
    $region10: #{ensemble_dynamics_forward.1} parent=1 // pred_check
      _
    $region11: #{ensemble_dynamics_forward.1} parent=1 // pred_check_branch
      %40 = sbr.rel (0) target = $region13
    $region12: #{ensemble_dynamics_forward.1} parent=1 // pred_region
      %s42 = ssub.s32 512, 512
      %43 = vsyncadd [#allocation5], %s42
      %s44 = sshll.u32 [#allocation6], 4
      %s45 = int_to_ptr.vmem [resolvable:$true] %s44
      %50 = dma.hbm_to_vmem [thread:$0]  %s2, 512, %s45, [#allocation5], 256, 256, 16
    $region13: #{ensemble_dynamics_forward.1} parent=1 // pred_fallthru
      _
    // Predicated region
    $region14: #{ensemble_dynamics_forward.1} parent=1 // pred_check
      _
    $region15: #{ensemble_dynamics_forward.1} parent=1 // pred_check_branch
      %52 = sbr.rel (0) target = $region17
    $region16: #{ensemble_dynamics_forward.1} parent=1 // pred_region
      %s54 = ssub.s32 256, 256
      %55 = vsyncadd [#allocation8], %s54
      %s57 = sshll.u32 [#allocation7], 4
      %s58 = int_to_ptr.vmem [resolvable:$true] %s57
      %60 = dma.hbm_to_vmem [thread:$0]  %s3, 256, %s58, [#allocation8]
    $region17: #{ensemble_dynamics_forward.1} parent=1 // pred_fallthru
      _
    // Predicated region
    $region18: #{ensemble_dynamics_forward.1} parent=1 // pred_check
      _
    $region19: #{ensemble_dynamics_forward.1} parent=1 // pred_check_branch
      %62 = sbr.rel (0) target = $region21
    $region20: #{ensemble_dynamics_forward.1} parent=1 // pred_region
      %s64 = ssub.s32 32, 32
      %65 = vsyncadd [#allocation8], %s64
      %s67 = sshll.u32 [#allocation9], 4
      %s68 = int_to_ptr.vmem [resolvable:$true] %s67
      %70 = dma.hbm_to_vmem [thread:$0]  %s4, 32, %s68, [#allocation8]
    $region21: #{ensemble_dynamics_forward.1} parent=1 // pred_fallthru
      _
    // Predicated region
    $region22: #{ensemble_dynamics_forward.1} parent=1 // pred_check
      _
    $region23: #{ensemble_dynamics_forward.1} parent=1 // pred_check_branch
      %72 = sbr.rel (0) target = $region25
    $region24: #{ensemble_dynamics_forward.1} parent=1 // pred_region
      %s74 = ssub.s32 2560, 2560
      %75 = vsyncadd [#allocation11], %s74
      %s76 = sshll.u32 [#allocation10], 4
      %s77 = int_to_ptr.vmem [resolvable:$true] %s76
      %82 = dma.hbm_to_vmem [thread:$0]  %s5, 2560, %s77, [#allocation11], 128, 128, 8
    $region25: #{ensemble_dynamics_forward.1} parent=1 // pred_fallthru
      _
    // Predicated region
    $region26: #{ensemble_dynamics_forward.1} parent=1 // pred_check
      _
    $region27: #{ensemble_dynamics_forward.1} parent=1 // pred_check_branch
      %84 = sbr.rel (0) target = $region29
    $region28: #{ensemble_dynamics_forward.1} parent=1 // pred_region
      _
    $region29: #{ensemble_dynamics_forward.1} parent=1 // pred_fallthru
      _
    // Predicated region
    $region30: #{ensemble_dynamics_forward.1} parent=1 // pred_check
      _
    $region31: #{ensemble_dynamics_forward.1} parent=1 // pred_check_branch
      %86 = sbr.rel (0) target = $region33
    $region32: #{ensemble_dynamics_forward.1} parent=1 // pred_region
      %s88 = ssub.s32 2560, 2560
      %89 = vsyncadd [#allocation11], %s88
      %s90 = sshll.u32 [#allocation12], 4
      %s91 = int_to_ptr.vmem [resolvable:$true] %s90
      %96 = dma.hbm_to_vmem [thread:$0]  %s7, 2560, %s91, [#allocation11], 128, 128, 8
    $region33: #{ensemble_dynamics_forward.1} parent=1 // pred_fallthru
      _
    // Predicated region
    $region34: #{ensemble_dynamics_forward.1} parent=1 // pred_check
      _
    $region35: #{ensemble_dynamics_forward.1} parent=1 // pred_check_branch
      %98 = sbr.rel (0) target = $region37
    $region36: #{ensemble_dynamics_forward.1} parent=1 // pred_region
      %s100 = ssub.s32 80, 80
      %101 = vsyncadd [#allocation14], %s100
      %s102 = sshll.u32 [#allocation13], 4
      %s103 = int_to_ptr.vmem [resolvable:$true] %s102
      %108 = dma.hbm_to_vmem [thread:$0]  %s8, 80, %s103, [#allocation14], 16, 16, 1
    $region37: #{ensemble_dynamics_forward.1} parent=1 // pred_fallthru
      _
    // Predicated region
    $region38: #{ensemble_dynamics_forward.1} parent=1 // pred_check
      _
    $region39: #{ensemble_dynamics_forward.1} parent=1 // pred_check_branch
      %110 = sbr.rel (0) target = $region41
    $region40: #{ensemble_dynamics_forward.1} parent=1 // pred_region
      %111 = dma.done [#allocation3], 128
    $region41: #{ensemble_dynamics_forward.1} parent=1 // pred_fallthru
      _
    // Predicated region
    $region42: #{ensemble_dynamics_forward.1} parent=1 // pred_check
      _
    $region43: #{ensemble_dynamics_forward.1} parent=1 // pred_check_branch
      %113 = sbr.rel (0) target = $region45
    $region44: #{ensemble_dynamics_forward.1} parent=1 // pred_region
      %114 = dma.done [#allocation5], 128
    $region45: #{ensemble_dynamics_forward.1} parent=1 // pred_fallthru
      _
    // Predicated region
    $region46: #{ensemble_dynamics_forward.1} parent=1 // pred_check
      _
    $region47: #{ensemble_dynamics_forward.1} parent=1 // pred_check_branch
      %116 = sbr.rel (0) target = $region49
    $region48: #{ensemble_dynamics_forward.1} parent=1 // pred_region
      %117 = dma.done [#allocation5], 512
    $region49: #{ensemble_dynamics_forward.1} parent=1 // pred_fallthru
      _
    // Predicated region
    $region50: #{ensemble_dynamics_forward.1} parent=1 // pred_check
      _
    $region51: #{ensemble_dynamics_forward.1} parent=1 // pred_check_branch
      %119 = sbr.rel (0) target = $region53
    $region52: #{ensemble_dynamics_forward.1} parent=1 // pred_region
      %120 = dma.done [#allocation8], 256
    $region53: #{ensemble_dynamics_forward.1} parent=1 // pred_fallthru
      _
    // Predicated region
    $region54: #{ensemble_dynamics_forward.1} parent=1 // pred_check
      _
    $region55: #{ensemble_dynamics_forward.1} parent=1 // pred_check_branch
      %122 = sbr.rel (0) target = $region57
    $region56: #{ensemble_dynamics_forward.1} parent=1 // pred_region
      %123 = dma.done [#allocation8], 32
    $region57: #{ensemble_dynamics_forward.1} parent=1 // pred_fallthru
      _
    // Predicated region
    $region58: #{ensemble_dynamics_forward.1} parent=1 // pred_check
      _
    $region59: #{ensemble_dynamics_forward.1} parent=1 // pred_check_branch
      %125 = sbr.rel (0) target = $region61
    $region60: #{ensemble_dynamics_forward.1} parent=1 // pred_region
      %126 = dma.done [#allocation11], 2560
    $region61: #{ensemble_dynamics_forward.1} parent=1 // pred_fallthru
      _
    // Predicated region
    $region62: #{ensemble_dynamics_forward.1} parent=1 // pred_check
      _
    $region63: #{ensemble_dynamics_forward.1} parent=1 // pred_check_branch
      %128 = sbr.rel (0) target = $region65
    $region64: #{ensemble_dynamics_forward.1} parent=1 // pred_region
      %129 = dma.done [#allocation11], 2560
    $region65: #{ensemble_dynamics_forward.1} parent=1 // pred_fallthru
      _
    // Predicated region
    $region66: #{ensemble_dynamics_forward.1} parent=1 // pred_check
      _
    $region67: #{ensemble_dynamics_forward.1} parent=1 // pred_check_branch
      %131 = sbr.rel (0) target = $region69
    $region68: #{ensemble_dynamics_forward.1} parent=1 // pred_region
      %132 = dma.done [#allocation14], 80
    $region69: #{ensemble_dynamics_forward.1} parent=1 // pred_fallthru
      _
    %v133 = vld [vmem:[#allocation2] sm:$0xff]
    %v134 = vld [vmem:[#allocation6] sm:$0xff]
    %v135 = vld [vmem:[#allocation6 + $0x8] sm:$0xff]
    %v136 = vld [vmem:[#allocation6 + $0x10] sm:$0xff]
    %v137 = vld [vmem:[#allocation6 + $0x18] sm:$0xff]
    %v138 = vld [vmem:[#allocation4] sm:$0xff]
    %v139 = vld [vmem:[#allocation7] sm:$0xff]
    %v140 = vld [vmem:[#allocation7 + $0x8] sm:$0xff]
    %vm141 = vcmask 64512
    %v143 = vsel %vm141, %v138, 0
    %145 = vmatprep.subr.mxu0 0.0
    %146 = vmatpush1.msra.mxu0 0.0
    %147 = vmatprep.subr.mxu0 0.0
    %148 = vmatpush1.msra.mxu0 0.0
    %149 = vmatprep.subr.mxu0 0.0
    %150 = vmatpush1.msra.mxu0 0.0
    %151 = vmatprep.subr.mxu0 0.0
    %152 = vmatpush1.msra.mxu0 0.0
    %153 = vmatprep.subr.mxu0 0.0
    %154 = vmatpush1.msra.mxu0 0.0
    %155 = vmatprep.subr.mxu0 0.0
    %156 = vmatpush1.msra.mxu0 0.0
    %157 = vmatprep.subr.mxu0 0.0
    %158 = vmatpush1.msra.mxu0 0.0
    %159 = vmatprep.subr.mxu0 0.0
    %160 = vmatpush1.msra.mxu0 0.0
    %161 = vmatprep.subr.mxu0 0.0
    %162 = vmatpush1.msra.mxu0 0.0
    %163 = vmatprep.subr.mxu0 0.0
    %164 = vmatpush1.msra.mxu0 0.0
    %165 = vmatprep.subr.mxu0 0.0
    %166 = vmatpush1.msra.mxu0 0.0
    %167 = vmatprep.subr.mxu0 0.0
    %168 = vmatpush1.msra.mxu0 0.0
    %169 = vmatprep.subr.mxu0 0.0
    %170 = vmatpush1.msra.mxu0 0.0
    %171 = vmatprep.subr.mxu0 0.0
    %172 = vmatpush1.msra.mxu0 0.0
    %173 = vmatprep.subr.mxu0 0.0
    %174 = vmatpush1.msra.mxu0 0.0
    %175 = vmatprep.subr.mxu0 %v140
    %176 = vmatpush1.msra.mxu0 %v139
    %177 = vmatprep.subr.mxu0 0.0
    %178 = vmatpush2.msra.mxu0 0.0
    %179 = vmatprep.subr.mxu0 0.0
    %180 = vmatpush2.msra.mxu0 0.0
    %181 = vmatprep.subr.mxu0 0.0
    %182 = vmatpush2.msra.mxu0 0.0
    %183 = vmatprep.subr.mxu0 0.0
    %184 = vmatpush2.msra.mxu0 0.0
    %185 = vmatprep.subr.mxu0 0.0
    %186 = vmatpush2.msra.mxu0 0.0
    %187 = vmatprep.subr.mxu0 0.0
    %188 = vmatpush2.msra.mxu0 0.0
    %189 = vmatprep.subr.mxu0 0.0
    %190 = vmatpush2.msra.mxu0 0.0
    %191 = vmatprep.subr.mxu0 0.0
    %192 = vmatpush2.msra.mxu0 0.0
    %193 = vmatprep.subr.mxu0 0.0
    %194 = vmatpush2.msra.mxu0 0.0
    %195 = vmatprep.subr.mxu0 0.0
    %196 = vmatpush2.msra.mxu0 0.0
    %197 = vmatprep.subr.mxu0 0.0
    %198 = vmatpush2.msra.mxu0 0.0
    %199 = vmatprep.subr.mxu0 0.0
    %200 = vmatpush2.msra.mxu0 0.0
    %201 = vmatprep.subr.mxu0 0.0
    %202 = vmatpush2.msra.mxu0 0.0
    %203 = vmatprep.subr.mxu0 0.0
    %204 = vmatpush2.msra.mxu0 0.0
    %205 = vmatprep.subr.mxu0 0.0
    %206 = vmatpush2.msra.mxu0 0.0
    %207 = vmatprep.subr.mxu0 0.0
    %208 = vmatpush2.msra.mxu0 0.0
    %209 = vmatprep.mubr.f32.mxu0 0.0
    %210 = vmatmul.mubr.f32.gmra.mxu0 %v143
    %v211 = vpop.f32.mrf.mxu0
    %v212 = vadd.f32 0.0, %v211
    %v213 = vpop.f32.mrf.mxu0
    %v214 = vadd.f32 0.0, %v213
    %215 = vdwg.mxu0
    %vm216 = vcmask 130048
    %v218 = vsel %vm216, %v133, 0
    %220 = vmatprep.subr.mxu0 0.0
    %221 = vmatpush1.msra.mxu0 0.0
    %222 = vmatprep.subr.mxu0 0.0
    %223 = vmatpush1.msra.mxu0 0.0
    %224 = vmatprep.subr.mxu0 0.0
    %225 = vmatpush1.msra.mxu0 0.0
    %226 = vmatprep.subr.mxu0 0.0
    %227 = vmatpush1.msra.mxu0 0.0
    %228 = vmatprep.subr.mxu0 0.0
    %229 = vmatpush1.msra.mxu0 0.0
    %230 = vmatprep.subr.mxu0 0.0
    %231 = vmatpush1.msra.mxu0 0.0
    %232 = vmatprep.subr.mxu0 0.0
    %233 = vmatpush1.msra.mxu0 0.0
    %234 = vmatprep.subr.mxu0 0.0
    %235 = vmatpush1.msra.mxu0 0.0
    %236 = vmatprep.subr.mxu0 0.0
    %237 = vmatpush1.msra.mxu0 0.0
    %238 = vmatprep.subr.mxu0 0.0
    %239 = vmatpush1.msra.mxu0 0.0
    %240 = vmatprep.subr.mxu0 0.0
    %241 = vmatpush1.msra.mxu0 0.0
    %242 = vmatprep.subr.mxu0 0.0
    %243 = vmatpush1.msra.mxu0 0.0
    %244 = vmatprep.subr.mxu0 0.0
    %245 = vmatpush1.msra.mxu0 0.0
    %246 = vmatprep.subr.mxu0 0.0
    %247 = vmatpush1.msra.mxu0 0.0
    %248 = vmatprep.subr.mxu0 %v137
    %249 = vmatpush1.msra.mxu0 %v136
    %250 = vmatprep.subr.mxu0 %v135
    %251 = vmatpush1.msra.mxu0 %v134
    %252 = vmatprep.subr.mxu0 0.0
    %253 = vmatpush2.msra.mxu0 0.0
    %254 = vmatprep.subr.mxu0 0.0
    %255 = vmatpush2.msra.mxu0 0.0
    %256 = vmatprep.subr.mxu0 0.0
    %257 = vmatpush2.msra.mxu0 0.0
    %258 = vmatprep.subr.mxu0 0.0
    %259 = vmatpush2.msra.mxu0 0.0
    %260 = vmatprep.subr.mxu0 0.0
    %261 = vmatpush2.msra.mxu0 0.0
    %262 = vmatprep.subr.mxu0 0.0
    %263 = vmatpush2.msra.mxu0 0.0
    %264 = vmatprep.subr.mxu0 0.0
    %265 = vmatpush2.msra.mxu0 0.0
    %266 = vmatprep.subr.mxu0 0.0
    %267 = vmatpush2.msra.mxu0 0.0
    %268 = vmatprep.subr.mxu0 0.0
    %269 = vmatpush2.msra.mxu0 0.0
    %270 = vmatprep.subr.mxu0 0.0
    %271 = vmatpush2.msra.mxu0 0.0
    %272 = vmatprep.subr.mxu0 0.0
    %273 = vmatpush2.msra.mxu0 0.0
    %274 = vmatprep.subr.mxu0 0.0
    %275 = vmatpush2.msra.mxu0 0.0
    %276 = vmatprep.subr.mxu0 0.0
    %277 = vmatpush2.msra.mxu0 0.0
    %278 = vmatprep.subr.mxu0 0.0
    %279 = vmatpush2.msra.mxu0 0.0
    %280 = vmatprep.subr.mxu0 0.0
    %281 = vmatpush2.msra.mxu0 0.0
    %282 = vmatprep.subr.mxu0 0.0
    %283 = vmatpush2.msra.mxu0 0.0
    %284 = vmatprep.mubr.f32.mxu0 0.0
    %285 = vmatmul.mubr.f32.gmra.mxu0 %v218
    %v286 = vpop.f32.mrf.mxu0
    %v287 = vadd.f32 %v212, %v286
    %v288 = vpop.f32.mrf.mxu0
    %v289 = vadd.f32 %v214, %v288
    %290 = vdwg.mxu0
    %v291 = vld [vmem:[#allocation9] sm:$0x3]
    %v293 = vlaneseq
    %v294 = vshrl.u32 %v293, 7
    %v295 = vsub.s32 0, %v294
    %v296 = vrot.slane %v291, %v295
    %v297 = vlaneseq
    %v298 = vshrl.u32 %v297, 7
    %v299 = vsub.s32 1, %v298
    %v300 = vrot.slane %v291, %v299
    %v303 = vadd.f32 %v287, %v296
    %v304 = vadd.f32 %v289, %v300
    %v305 = vmax.f32 %v303, 0.0
    %v306 = vmax.f32 %v304, 0.0
    %v307 = vld [vmem:[#allocation10] sm:$0xff]
    %v308 = vld [vmem:[#allocation10 + $0x8] sm:$0xff]
    %v309 = vld [vmem:[#allocation10 + $0x10] sm:$0xff]
    %v310 = vld [vmem:[#allocation10 + $0x18] sm:$0xff]
    %v311 = vld [vmem:[%s6] sm:$0x1]
    %v313 = vlaneseq
    %v314 = vshrl.u32 %v313, 7
    %v315 = vsub.s32 0, %v314
    %v316 = vrot.slane %v311, %v315
    %vm318 = vcmask 261120
    %v320 = vsel %vm318, %v305, 0
    %322 = vmatprep.subr.mxu0 0.0
    %323 = vmatpush1.msra.mxu0 0.0
    %324 = vmatprep.subr.mxu0 0.0
    %325 = vmatpush1.msra.mxu0 0.0
    %326 = vmatprep.subr.mxu0 0.0
    %327 = vmatpush1.msra.mxu0 0.0
    %328 = vmatprep.subr.mxu0 0.0
    %329 = vmatpush1.msra.mxu0 0.0
    %330 = vmatprep.subr.mxu0 0.0
    %331 = vmatpush1.msra.mxu0 0.0
    %332 = vmatprep.subr.mxu0 0.0
    %333 = vmatpush1.msra.mxu0 0.0
    %334 = vmatprep.subr.mxu0 0.0
    %335 = vmatpush1.msra.mxu0 0.0
    %336 = vmatprep.subr.mxu0 0.0
    %337 = vmatpush1.msra.mxu0 0.0
    %338 = vmatprep.subr.mxu0 0.0
    %339 = vmatpush1.msra.mxu0 0.0
    %340 = vmatprep.subr.mxu0 0.0
    %341 = vmatpush1.msra.mxu0 0.0
    %342 = vmatprep.subr.mxu0 0.0
    %343 = vmatpush1.msra.mxu0 0.0
    %344 = vmatprep.subr.mxu0 0.0
    %345 = vmatpush1.msra.mxu0 0.0
    %346 = vmatprep.subr.mxu0 0.0
    %347 = vmatpush1.msra.mxu0 %v310
    %348 = vmatprep.subr.mxu0 0.0
    %349 = vmatpush1.msra.mxu0 %v309
    %350 = vmatprep.subr.mxu0 0.0
    %351 = vmatpush1.msra.mxu0 %v308
    %352 = vmatprep.subr.mxu0 0.0
    %353 = vmatpush1.msra.mxu0 %v307
    %354 = vmatprep.subr.mxu0 0.0
    %355 = vmatpush2.msra.mxu0 0.0
    %356 = vmatprep.subr.mxu0 0.0
    %357 = vmatpush2.msra.mxu0 0.0
    %358 = vmatprep.subr.mxu0 0.0
    %359 = vmatpush2.msra.mxu0 0.0
    %360 = vmatprep.subr.mxu0 0.0
    %361 = vmatpush2.msra.mxu0 0.0
    %362 = vmatprep.subr.mxu0 0.0
    %363 = vmatpush2.msra.mxu0 0.0
    %364 = vmatprep.subr.mxu0 0.0
    %365 = vmatpush2.msra.mxu0 0.0
    %366 = vmatprep.subr.mxu0 0.0
    %367 = vmatpush2.msra.mxu0 0.0
    %368 = vmatprep.subr.mxu0 0.0
    %369 = vmatpush2.msra.mxu0 0.0
    %370 = vmatprep.subr.mxu0 0.0
    %371 = vmatpush2.msra.mxu0 0.0
    %372 = vmatprep.subr.mxu0 0.0
    %373 = vmatpush2.msra.mxu0 0.0
    %374 = vmatprep.subr.mxu0 0.0
    %375 = vmatpush2.msra.mxu0 0.0
    %376 = vmatprep.subr.mxu0 0.0
    %377 = vmatpush2.msra.mxu0 0.0
    %378 = vmatprep.subr.mxu0 0.0
    %379 = vmatpush2.msra.mxu0 0.0
    %380 = vmatprep.subr.mxu0 0.0
    %381 = vmatpush2.msra.mxu0 0.0
    %382 = vmatprep.subr.mxu0 0.0
    %383 = vmatpush2.msra.mxu0 0.0
    %384 = vmatprep.subr.mxu0 0.0
    %385 = vmatpush2.msra.mxu0 0.0
    %386 = vmatprep.mubr.f32.mxu0 0.0
    %387 = vmatmul.mubr.f32.gmra.mxu0 %v320
    %v388 = vpop.f32.mrf.mxu0
    %v389 = vadd.f32 %v316, %v388
    %v390 = vpop.f32.mrf.mxu0
    %391 = vdwg.mxu0
    %v392 = vmax.f32 %v389, 0.0
    %v393 = vld [vmem:[#allocation12] sm:$0xff]
    %v394 = vld [vmem:[#allocation12 + $0x8] sm:$0xff]
    %v395 = vld [vmem:[#allocation12 + $0x10] sm:$0xff]
    %v396 = vld [vmem:[#allocation12 + $0x18] sm:$0xff]
    %v397 = vld [vmem:[#allocation13] sm:$0x1]
    %v399 = vlaneseq
    %v400 = vshrl.u32 %v399, 7
    %v401 = vsub.s32 0, %v400
    %v402 = vrot.slane %v397, %v401
    %v405 = vsel %vm318, %v392, 0
    %407 = vmatprep.subr.mxu0 0.0
    %408 = vmatpush1.msra.mxu0 0.0
    %409 = vmatprep.subr.mxu0 0.0
    %410 = vmatpush1.msra.mxu0 0.0
    %411 = vmatprep.subr.mxu0 0.0
    %412 = vmatpush1.msra.mxu0 0.0
    %413 = vmatprep.subr.mxu0 0.0
    %414 = vmatpush1.msra.mxu0 0.0
    %415 = vmatprep.subr.mxu0 0.0
    %416 = vmatpush1.msra.mxu0 0.0
    %417 = vmatprep.subr.mxu0 0.0
    %418 = vmatpush1.msra.mxu0 0.0
    %419 = vmatprep.subr.mxu0 0.0
    %420 = vmatpush1.msra.mxu0 0.0
    %421 = vmatprep.subr.mxu0 0.0
    %422 = vmatpush1.msra.mxu0 0.0
    %423 = vmatprep.subr.mxu0 0.0
    %424 = vmatpush1.msra.mxu0 0.0
    %425 = vmatprep.subr.mxu0 0.0
    %426 = vmatpush1.msra.mxu0 0.0
    %427 = vmatprep.subr.mxu0 0.0
    %428 = vmatpush1.msra.mxu0 0.0
    %429 = vmatprep.subr.mxu0 0.0
    %430 = vmatpush1.msra.mxu0 0.0
    %431 = vmatprep.subr.mxu0 0.0
    %432 = vmatpush1.msra.mxu0 %v396
    %433 = vmatprep.subr.mxu0 0.0
    %434 = vmatpush1.msra.mxu0 %v395
    %435 = vmatprep.subr.mxu0 0.0
    %436 = vmatpush1.msra.mxu0 %v394
    %437 = vmatprep.subr.mxu0 0.0
    %438 = vmatpush1.msra.mxu0 %v393
    %439 = vmatprep.subr.mxu0 0.0
    %440 = vmatpush2.msra.mxu0 0.0
    %441 = vmatprep.subr.mxu0 0.0
    %442 = vmatpush2.msra.mxu0 0.0
    %443 = vmatprep.subr.mxu0 0.0
    %444 = vmatpush2.msra.mxu0 0.0
    %445 = vmatprep.subr.mxu0 0.0
    %446 = vmatpush2.msra.mxu0 0.0
    %447 = vmatprep.subr.mxu0 0.0
    %448 = vmatpush2.msra.mxu0 0.0
    %449 = vmatprep.subr.mxu0 0.0
    %450 = vmatpush2.msra.mxu0 0.0
    %451 = vmatprep.subr.mxu0 0.0
    %452 = vmatpush2.msra.mxu0 0.0
    %453 = vmatprep.subr.mxu0 0.0
    %454 = vmatpush2.msra.mxu0 0.0
    %455 = vmatprep.subr.mxu0 0.0
    %456 = vmatpush2.msra.mxu0 0.0
    %457 = vmatprep.subr.mxu0 0.0
    %458 = vmatpush2.msra.mxu0 0.0
    %459 = vmatprep.subr.mxu0 0.0
    %460 = vmatpush2.msra.mxu0 0.0
    %461 = vmatprep.subr.mxu0 0.0
    %462 = vmatpush2.msra.mxu0 0.0
    %463 = vmatprep.subr.mxu0 0.0
    %464 = vmatpush2.msra.mxu0 0.0
    %465 = vmatprep.subr.mxu0 0.0
    %466 = vmatpush2.msra.mxu0 0.0
    %467 = vmatprep.subr.mxu0 0.0
    %468 = vmatpush2.msra.mxu0 0.0
    %469 = vmatprep.subr.mxu0 0.0
    %470 = vmatpush2.msra.mxu0 0.0
    %471 = vmatprep.mubr.f32.mxu0 0.0
    %472 = vmatmul.mubr.f32.gmra.mxu0 %v405
    %v473 = vpop.f32.mrf.mxu0
    %v474 = vadd.f32 %v402, %v473
    %v475 = vpop.f32.mrf.mxu0
    %476 = vdwg.mxu0
    %477 = vst [vmem:[%s9] sm:$0xff] %v474
    %s478 = scalar_lea.vmem [#allocation10], 32
    %v479 = vld [vmem:[%s478] sm:$0xff]
    %v480 = vld [vmem:[%s478 + $0x8] sm:$0xff]
    %v481 = vld [vmem:[%s478 + $0x10] sm:$0xff]
    %v482 = vld [vmem:[%s478 + $0x18] sm:$0xff]
    %s483 = scalar_lea.vmem %s6, 1
    %v484 = vld [vmem:[%s483] sm:$0x1]
    %v486 = vlaneseq
    %v487 = vshrl.u32 %v486, 7
    %v488 = vsub.s32 0, %v487
    %v489 = vrot.slane %v484, %v488
    %491 = vrot.lane.b32.xlu0 %v305, 96
    %v492 = vpop.permute.xlu0 %491
    %v493 = vsel %vm318, %v492, 0
    %495 = vmatprep.subr.mxu0 0.0
    %496 = vmatpush1.msra.mxu0 0.0
    %497 = vmatprep.subr.mxu0 0.0
    %498 = vmatpush1.msra.mxu0 0.0
    %499 = vmatprep.subr.mxu0 0.0
    %500 = vmatpush1.msra.mxu0 0.0
    %501 = vmatprep.subr.mxu0 0.0
    %502 = vmatpush1.msra.mxu0 0.0
    %503 = vmatprep.subr.mxu0 0.0
    %504 = vmatpush1.msra.mxu0 0.0
    %505 = vmatprep.subr.mxu0 0.0
    %506 = vmatpush1.msra.mxu0 0.0
    %507 = vmatprep.subr.mxu0 0.0
    %508 = vmatpush1.msra.mxu0 0.0
    %509 = vmatprep.subr.mxu0 0.0
    %510 = vmatpush1.msra.mxu0 0.0
    %511 = vmatprep.subr.mxu0 0.0
    %512 = vmatpush1.msra.mxu0 0.0
    %513 = vmatprep.subr.mxu0 0.0
    %514 = vmatpush1.msra.mxu0 0.0
    %515 = vmatprep.subr.mxu0 0.0
    %516 = vmatpush1.msra.mxu0 0.0
    %517 = vmatprep.subr.mxu0 0.0
    %518 = vmatpush1.msra.mxu0 0.0
    %519 = vmatprep.subr.mxu0 0.0
    %520 = vmatpush1.msra.mxu0 %v482
    %521 = vmatprep.subr.mxu0 0.0
    %522 = vmatpush1.msra.mxu0 %v481
    %523 = vmatprep.subr.mxu0 0.0
    %524 = vmatpush1.msra.mxu0 %v480
    %525 = vmatprep.subr.mxu0 0.0
    %526 = vmatpush1.msra.mxu0 %v479
    %527 = vmatprep.subr.mxu0 0.0
    %528 = vmatpush2.msra.mxu0 0.0
    %529 = vmatprep.subr.mxu0 0.0
    %530 = vmatpush2.msra.mxu0 0.0
    %531 = vmatprep.subr.mxu0 0.0
    %532 = vmatpush2.msra.mxu0 0.0
    %533 = vmatprep.subr.mxu0 0.0
    %534 = vmatpush2.msra.mxu0 0.0
    %535 = vmatprep.subr.mxu0 0.0
    %536 = vmatpush2.msra.mxu0 0.0
    %537 = vmatprep.subr.mxu0 0.0
    %538 = vmatpush2.msra.mxu0 0.0
    %539 = vmatprep.subr.mxu0 0.0
    %540 = vmatpush2.msra.mxu0 0.0
    %541 = vmatprep.subr.mxu0 0.0
    %542 = vmatpush2.msra.mxu0 0.0
    %543 = vmatprep.subr.mxu0 0.0
    %544 = vmatpush2.msra.mxu0 0.0
    %545 = vmatprep.subr.mxu0 0.0
    %546 = vmatpush2.msra.mxu0 0.0
    %547 = vmatprep.subr.mxu0 0.0
    %548 = vmatpush2.msra.mxu0 0.0
    %549 = vmatprep.subr.mxu0 0.0
    %550 = vmatpush2.msra.mxu0 0.0
    %551 = vmatprep.subr.mxu0 0.0
    %552 = vmatpush2.msra.mxu0 0.0
    %553 = vmatprep.subr.mxu0 0.0
    %554 = vmatpush2.msra.mxu0 0.0
    %555 = vmatprep.subr.mxu0 0.0
    %556 = vmatpush2.msra.mxu0 0.0
    %557 = vmatprep.subr.mxu0 0.0
    %558 = vmatpush2.msra.mxu0 0.0
    %559 = vmatprep.mubr.f32.mxu0 0.0
    %560 = vmatmul.mubr.f32.gmra.mxu0 %v493
    %v561 = vpop.f32.mrf.mxu0
    %v562 = vadd.f32 %v489, %v561
    %v563 = vpop.f32.mrf.mxu0
    %564 = vdwg.mxu0
    %v565 = vmax.f32 %v562, 0.0
    %s566 = scalar_lea.vmem [#allocation12], 32
    %v567 = vld [vmem:[%s566] sm:$0xff]
    %v568 = vld [vmem:[%s566 + $0x8] sm:$0xff]
    %v569 = vld [vmem:[%s566 + $0x10] sm:$0xff]
    %v570 = vld [vmem:[%s566 + $0x18] sm:$0xff]
    %s571 = scalar_lea.vmem [#allocation13], 1
    %v572 = vld [vmem:[%s571] sm:$0x1]
    %v574 = vlaneseq
    %v575 = vshrl.u32 %v574, 7
    %v576 = vsub.s32 0, %v575
    %v577 = vrot.slane %v572, %v576
    %v580 = vsel %vm318, %v565, 0
    %582 = vmatprep.subr.mxu0 0.0
    %583 = vmatpush1.msra.mxu0 0.0
    %584 = vmatprep.subr.mxu0 0.0
    %585 = vmatpush1.msra.mxu0 0.0
    %586 = vmatprep.subr.mxu0 0.0
    %587 = vmatpush1.msra.mxu0 0.0
    %588 = vmatprep.subr.mxu0 0.0
    %589 = vmatpush1.msra.mxu0 0.0
    %590 = vmatprep.subr.mxu0 0.0
    %591 = vmatpush1.msra.mxu0 0.0
    %592 = vmatprep.subr.mxu0 0.0
    %593 = vmatpush1.msra.mxu0 0.0
    %594 = vmatprep.subr.mxu0 0.0
    %595 = vmatpush1.msra.mxu0 0.0
    %596 = vmatprep.subr.mxu0 0.0
    %597 = vmatpush1.msra.mxu0 0.0
    %598 = vmatprep.subr.mxu0 0.0
    %599 = vmatpush1.msra.mxu0 0.0
    %600 = vmatprep.subr.mxu0 0.0
    %601 = vmatpush1.msra.mxu0 0.0
    %602 = vmatprep.subr.mxu0 0.0
    %603 = vmatpush1.msra.mxu0 0.0
    %604 = vmatprep.subr.mxu0 0.0
    %605 = vmatpush1.msra.mxu0 0.0
    %606 = vmatprep.subr.mxu0 0.0
    %607 = vmatpush1.msra.mxu0 %v570
    %608 = vmatprep.subr.mxu0 0.0
    %609 = vmatpush1.msra.mxu0 %v569
    %610 = vmatprep.subr.mxu0 0.0
    %611 = vmatpush1.msra.mxu0 %v568
    %612 = vmatprep.subr.mxu0 0.0
    %613 = vmatpush1.msra.mxu0 %v567
    %614 = vmatprep.subr.mxu0 0.0
    %615 = vmatpush2.msra.mxu0 0.0
    %616 = vmatprep.subr.mxu0 0.0
    %617 = vmatpush2.msra.mxu0 0.0
    %618 = vmatprep.subr.mxu0 0.0
    %619 = vmatpush2.msra.mxu0 0.0
    %620 = vmatprep.subr.mxu0 0.0
    %621 = vmatpush2.msra.mxu0 0.0
    %622 = vmatprep.subr.mxu0 0.0
    %623 = vmatpush2.msra.mxu0 0.0
    %624 = vmatprep.subr.mxu0 0.0
    %625 = vmatpush2.msra.mxu0 0.0
    %626 = vmatprep.subr.mxu0 0.0
    %627 = vmatpush2.msra.mxu0 0.0
    %628 = vmatprep.subr.mxu0 0.0
    %629 = vmatpush2.msra.mxu0 0.0
    %630 = vmatprep.subr.mxu0 0.0
    %631 = vmatpush2.msra.mxu0 0.0
    %632 = vmatprep.subr.mxu0 0.0
    %633 = vmatpush2.msra.mxu0 0.0
    %634 = vmatprep.subr.mxu0 0.0
    %635 = vmatpush2.msra.mxu0 0.0
    %636 = vmatprep.subr.mxu0 0.0
    %637 = vmatpush2.msra.mxu0 0.0
    %638 = vmatprep.subr.mxu0 0.0
    %639 = vmatpush2.msra.mxu0 0.0
    %640 = vmatprep.subr.mxu0 0.0
    %641 = vmatpush2.msra.mxu0 0.0
    %642 = vmatprep.subr.mxu0 0.0
    %643 = vmatpush2.msra.mxu0 0.0
    %644 = vmatprep.subr.mxu0 0.0
    %645 = vmatpush2.msra.mxu0 0.0
    %646 = vmatprep.mubr.f32.mxu0 0.0
    %647 = vmatmul.mubr.f32.gmra.mxu0 %v580
    %v648 = vpop.f32.mrf.mxu0
    %v649 = vadd.f32 %v577, %v648
    %v650 = vpop.f32.mrf.mxu0
    %651 = vdwg.mxu0
    %s652 = scalar_lea.vmem %s9, 8
    %653 = vst [vmem:[%s652] sm:$0xff] %v649
    %s654 = scalar_lea.vmem [#allocation10], 64
    %v655 = vld [vmem:[%s654] sm:$0xff]
    %v656 = vld [vmem:[%s654 + $0x8] sm:$0xff]
    %v657 = vld [vmem:[%s654 + $0x10] sm:$0xff]
    %v658 = vld [vmem:[%s654 + $0x18] sm:$0xff]
    %s659 = scalar_lea.vmem %s6, 2
    %v660 = vld [vmem:[%s659] sm:$0x1]
    %v662 = vlaneseq
    %v663 = vshrl.u32 %v662, 7
    %v664 = vsub.s32 0, %v663
    %v665 = vrot.slane %v660, %v664
    %667 = vrot.lane.b32.xlu0 %v305, 64
    %v668 = vpop.permute.xlu0 %667
    %v669 = vsel %vm318, %v668, 0
    %671 = vmatprep.subr.mxu0 0.0
    %672 = vmatpush1.msra.mxu0 0.0
    %673 = vmatprep.subr.mxu0 0.0
    %674 = vmatpush1.msra.mxu0 0.0
    %675 = vmatprep.subr.mxu0 0.0
    %676 = vmatpush1.msra.mxu0 0.0
    %677 = vmatprep.subr.mxu0 0.0
    %678 = vmatpush1.msra.mxu0 0.0
    %679 = vmatprep.subr.mxu0 0.0
    %680 = vmatpush1.msra.mxu0 0.0
    %681 = vmatprep.subr.mxu0 0.0
    %682 = vmatpush1.msra.mxu0 0.0
    %683 = vmatprep.subr.mxu0 0.0
    %684 = vmatpush1.msra.mxu0 0.0
    %685 = vmatprep.subr.mxu0 0.0
    %686 = vmatpush1.msra.mxu0 0.0
    %687 = vmatprep.subr.mxu0 0.0
    %688 = vmatpush1.msra.mxu0 0.0
    %689 = vmatprep.subr.mxu0 0.0
    %690 = vmatpush1.msra.mxu0 0.0
    %691 = vmatprep.subr.mxu0 0.0
    %692 = vmatpush1.msra.mxu0 0.0
    %693 = vmatprep.subr.mxu0 0.0
    %694 = vmatpush1.msra.mxu0 0.0
    %695 = vmatprep.subr.mxu0 0.0
    %696 = vmatpush1.msra.mxu0 %v658
    %697 = vmatprep.subr.mxu0 0.0
    %698 = vmatpush1.msra.mxu0 %v657
    %699 = vmatprep.subr.mxu0 0.0
    %700 = vmatpush1.msra.mxu0 %v656
    %701 = vmatprep.subr.mxu0 0.0
    %702 = vmatpush1.msra.mxu0 %v655
    %703 = vmatprep.subr.mxu0 0.0
    %704 = vmatpush2.msra.mxu0 0.0
    %705 = vmatprep.subr.mxu0 0.0
    %706 = vmatpush2.msra.mxu0 0.0
    %707 = vmatprep.subr.mxu0 0.0
    %708 = vmatpush2.msra.mxu0 0.0
    %709 = vmatprep.subr.mxu0 0.0
    %710 = vmatpush2.msra.mxu0 0.0
    %711 = vmatprep.subr.mxu0 0.0
    %712 = vmatpush2.msra.mxu0 0.0
    %713 = vmatprep.subr.mxu0 0.0
    %714 = vmatpush2.msra.mxu0 0.0
    %715 = vmatprep.subr.mxu0 0.0
    %716 = vmatpush2.msra.mxu0 0.0
    %717 = vmatprep.subr.mxu0 0.0
    %718 = vmatpush2.msra.mxu0 0.0
    %719 = vmatprep.subr.mxu0 0.0
    %720 = vmatpush2.msra.mxu0 0.0
    %721 = vmatprep.subr.mxu0 0.0
    %722 = vmatpush2.msra.mxu0 0.0
    %723 = vmatprep.subr.mxu0 0.0
    %724 = vmatpush2.msra.mxu0 0.0
    %725 = vmatprep.subr.mxu0 0.0
    %726 = vmatpush2.msra.mxu0 0.0
    %727 = vmatprep.subr.mxu0 0.0
    %728 = vmatpush2.msra.mxu0 0.0
    %729 = vmatprep.subr.mxu0 0.0
    %730 = vmatpush2.msra.mxu0 0.0
    %731 = vmatprep.subr.mxu0 0.0
    %732 = vmatpush2.msra.mxu0 0.0
    %733 = vmatprep.subr.mxu0 0.0
    %734 = vmatpush2.msra.mxu0 0.0
    %735 = vmatprep.mubr.f32.mxu0 0.0
    %736 = vmatmul.mubr.f32.gmra.mxu0 %v669
    %v737 = vpop.f32.mrf.mxu0
    %v738 = vadd.f32 %v665, %v737
    %v739 = vpop.f32.mrf.mxu0
    %740 = vdwg.mxu0
    %v741 = vmax.f32 %v738, 0.0
    %s742 = scalar_lea.vmem [#allocation12], 64
    %v743 = vld [vmem:[%s742] sm:$0xff]
    %v744 = vld [vmem:[%s742 + $0x8] sm:$0xff]
    %v745 = vld [vmem:[%s742 + $0x10] sm:$0xff]
    %v746 = vld [vmem:[%s742 + $0x18] sm:$0xff]
    %s747 = scalar_lea.vmem [#allocation13], 2
    %v748 = vld [vmem:[%s747] sm:$0x1]
    %v750 = vlaneseq
    %v751 = vshrl.u32 %v750, 7
    %v752 = vsub.s32 0, %v751
    %v753 = vrot.slane %v748, %v752
    %v756 = vsel %vm318, %v741, 0
    %758 = vmatprep.subr.mxu0 0.0
    %759 = vmatpush1.msra.mxu0 0.0
    %760 = vmatprep.subr.mxu0 0.0
    %761 = vmatpush1.msra.mxu0 0.0
    %762 = vmatprep.subr.mxu0 0.0
    %763 = vmatpush1.msra.mxu0 0.0
    %764 = vmatprep.subr.mxu0 0.0
    %765 = vmatpush1.msra.mxu0 0.0
    %766 = vmatprep.subr.mxu0 0.0
    %767 = vmatpush1.msra.mxu0 0.0
    %768 = vmatprep.subr.mxu0 0.0
    %769 = vmatpush1.msra.mxu0 0.0
    %770 = vmatprep.subr.mxu0 0.0
    %771 = vmatpush1.msra.mxu0 0.0
    %772 = vmatprep.subr.mxu0 0.0
    %773 = vmatpush1.msra.mxu0 0.0
    %774 = vmatprep.subr.mxu0 0.0
    %775 = vmatpush1.msra.mxu0 0.0
    %776 = vmatprep.subr.mxu0 0.0
    %777 = vmatpush1.msra.mxu0 0.0
    %778 = vmatprep.subr.mxu0 0.0
    %779 = vmatpush1.msra.mxu0 0.0
    %780 = vmatprep.subr.mxu0 0.0
    %781 = vmatpush1.msra.mxu0 0.0
    %782 = vmatprep.subr.mxu0 0.0
    %783 = vmatpush1.msra.mxu0 %v746
    %784 = vmatprep.subr.mxu0 0.0
    %785 = vmatpush1.msra.mxu0 %v745
    %786 = vmatprep.subr.mxu0 0.0
    %787 = vmatpush1.msra.mxu0 %v744
    %788 = vmatprep.subr.mxu0 0.0
    %789 = vmatpush1.msra.mxu0 %v743
    %790 = vmatprep.subr.mxu0 0.0
    %791 = vmatpush2.msra.mxu0 0.0
    %792 = vmatprep.subr.mxu0 0.0
    %793 = vmatpush2.msra.mxu0 0.0
    %794 = vmatprep.subr.mxu0 0.0
    %795 = vmatpush2.msra.mxu0 0.0
    %796 = vmatprep.subr.mxu0 0.0
    %797 = vmatpush2.msra.mxu0 0.0
    %798 = vmatprep.subr.mxu0 0.0
    %799 = vmatpush2.msra.mxu0 0.0
    %800 = vmatprep.subr.mxu0 0.0
    %801 = vmatpush2.msra.mxu0 0.0
    %802 = vmatprep.subr.mxu0 0.0
    %803 = vmatpush2.msra.mxu0 0.0
    %804 = vmatprep.subr.mxu0 0.0
    %805 = vmatpush2.msra.mxu0 0.0
    %806 = vmatprep.subr.mxu0 0.0
    %807 = vmatpush2.msra.mxu0 0.0
    %808 = vmatprep.subr.mxu0 0.0
    %809 = vmatpush2.msra.mxu0 0.0
    %810 = vmatprep.subr.mxu0 0.0
    %811 = vmatpush2.msra.mxu0 0.0
    %812 = vmatprep.subr.mxu0 0.0
    %813 = vmatpush2.msra.mxu0 0.0
    %814 = vmatprep.subr.mxu0 0.0
    %815 = vmatpush2.msra.mxu0 0.0
    %816 = vmatprep.subr.mxu0 0.0
    %817 = vmatpush2.msra.mxu0 0.0
    %818 = vmatprep.subr.mxu0 0.0
    %819 = vmatpush2.msra.mxu0 0.0
    %820 = vmatprep.subr.mxu0 0.0
    %821 = vmatpush2.msra.mxu0 0.0
    %822 = vmatprep.mubr.f32.mxu0 0.0
    %823 = vmatmul.mubr.f32.gmra.mxu0 %v756
    %v824 = vpop.f32.mrf.mxu0
    %v825 = vadd.f32 %v753, %v824
    %v826 = vpop.f32.mrf.mxu0
    %827 = vdwg.mxu0
    %s828 = scalar_lea.vmem %s9, 16
    %829 = vst [vmem:[%s828] sm:$0xff] %v825
    %s830 = scalar_lea.vmem [#allocation10], 96
    %v831 = vld [vmem:[%s830] sm:$0xff]
    %v832 = vld [vmem:[%s830 + $0x8] sm:$0xff]
    %v833 = vld [vmem:[%s830 + $0x10] sm:$0xff]
    %v834 = vld [vmem:[%s830 + $0x18] sm:$0xff]
    %s835 = scalar_lea.vmem %s6, 3
    %v836 = vld [vmem:[%s835] sm:$0x1]
    %v838 = vlaneseq
    %v839 = vshrl.u32 %v838, 7
    %v840 = vsub.s32 0, %v839
    %v841 = vrot.slane %v836, %v840
    %843 = vrot.lane.b32.xlu0 %v305, 32
    %v844 = vpop.permute.xlu0 %843
    %v845 = vsel %vm318, %v844, 0
    %847 = vmatprep.subr.mxu0 0.0
    %848 = vmatpush1.msra.mxu0 0.0
    %849 = vmatprep.subr.mxu0 0.0
    %850 = vmatpush1.msra.mxu0 0.0
    %851 = vmatprep.subr.mxu0 0.0
    %852 = vmatpush1.msra.mxu0 0.0
    %853 = vmatprep.subr.mxu0 0.0
    %854 = vmatpush1.msra.mxu0 0.0
    %855 = vmatprep.subr.mxu0 0.0
    %856 = vmatpush1.msra.mxu0 0.0
    %857 = vmatprep.subr.mxu0 0.0
    %858 = vmatpush1.msra.mxu0 0.0
    %859 = vmatprep.subr.mxu0 0.0
    %860 = vmatpush1.msra.mxu0 0.0
    %861 = vmatprep.subr.mxu0 0.0
    %862 = vmatpush1.msra.mxu0 0.0
    %863 = vmatprep.subr.mxu0 0.0
    %864 = vmatpush1.msra.mxu0 0.0
    %865 = vmatprep.subr.mxu0 0.0
    %866 = vmatpush1.msra.mxu0 0.0
    %867 = vmatprep.subr.mxu0 0.0
    %868 = vmatpush1.msra.mxu0 0.0
    %869 = vmatprep.subr.mxu0 0.0
    %870 = vmatpush1.msra.mxu0 0.0
    %871 = vmatprep.subr.mxu0 0.0
    %872 = vmatpush1.msra.mxu0 %v834
    %873 = vmatprep.subr.mxu0 0.0
    %874 = vmatpush1.msra.mxu0 %v833
    %875 = vmatprep.subr.mxu0 0.0
    %876 = vmatpush1.msra.mxu0 %v832
    %877 = vmatprep.subr.mxu0 0.0
    %878 = vmatpush1.msra.mxu0 %v831
    %879 = vmatprep.subr.mxu0 0.0
    %880 = vmatpush2.msra.mxu0 0.0
    %881 = vmatprep.subr.mxu0 0.0
    %882 = vmatpush2.msra.mxu0 0.0
    %883 = vmatprep.subr.mxu0 0.0
    %884 = vmatpush2.msra.mxu0 0.0
    %885 = vmatprep.subr.mxu0 0.0
    %886 = vmatpush2.msra.mxu0 0.0
    %887 = vmatprep.subr.mxu0 0.0
    %888 = vmatpush2.msra.mxu0 0.0
    %889 = vmatprep.subr.mxu0 0.0
    %890 = vmatpush2.msra.mxu0 0.0
    %891 = vmatprep.subr.mxu0 0.0
    %892 = vmatpush2.msra.mxu0 0.0
    %893 = vmatprep.subr.mxu0 0.0
    %894 = vmatpush2.msra.mxu0 0.0
    %895 = vmatprep.subr.mxu0 0.0
    %896 = vmatpush2.msra.mxu0 0.0
    %897 = vmatprep.subr.mxu0 0.0
    %898 = vmatpush2.msra.mxu0 0.0
    %899 = vmatprep.subr.mxu0 0.0
    %900 = vmatpush2.msra.mxu0 0.0
    %901 = vmatprep.subr.mxu0 0.0
    %902 = vmatpush2.msra.mxu0 0.0
    %903 = vmatprep.subr.mxu0 0.0
    %904 = vmatpush2.msra.mxu0 0.0
    %905 = vmatprep.subr.mxu0 0.0
    %906 = vmatpush2.msra.mxu0 0.0
    %907 = vmatprep.subr.mxu0 0.0
    %908 = vmatpush2.msra.mxu0 0.0
    %909 = vmatprep.subr.mxu0 0.0
    %910 = vmatpush2.msra.mxu0 0.0
    %911 = vmatprep.mubr.f32.mxu0 0.0
    %912 = vmatmul.mubr.f32.gmra.mxu0 %v845
    %v913 = vpop.f32.mrf.mxu0
    %v914 = vadd.f32 %v841, %v913
    %v915 = vpop.f32.mrf.mxu0
    %916 = vdwg.mxu0
    %v917 = vmax.f32 %v914, 0.0
    %s918 = scalar_lea.vmem [#allocation12], 96
    %v919 = vld [vmem:[%s918] sm:$0xff]
    %v920 = vld [vmem:[%s918 + $0x8] sm:$0xff]
    %v921 = vld [vmem:[%s918 + $0x10] sm:$0xff]
    %v922 = vld [vmem:[%s918 + $0x18] sm:$0xff]
    %s923 = scalar_lea.vmem [#allocation13], 3
    %v924 = vld [vmem:[%s923] sm:$0x1]
    %v926 = vlaneseq
    %v927 = vshrl.u32 %v926, 7
    %v928 = vsub.s32 0, %v927
    %v929 = vrot.slane %v924, %v928
    %v932 = vsel %vm318, %v917, 0
    %934 = vmatprep.subr.mxu0 0.0
    %935 = vmatpush1.msra.mxu0 0.0
    %936 = vmatprep.subr.mxu0 0.0
    %937 = vmatpush1.msra.mxu0 0.0
    %938 = vmatprep.subr.mxu0 0.0
    %939 = vmatpush1.msra.mxu0 0.0
    %940 = vmatprep.subr.mxu0 0.0
    %941 = vmatpush1.msra.mxu0 0.0
    %942 = vmatprep.subr.mxu0 0.0
    %943 = vmatpush1.msra.mxu0 0.0
    %944 = vmatprep.subr.mxu0 0.0
    %945 = vmatpush1.msra.mxu0 0.0
    %946 = vmatprep.subr.mxu0 0.0
    %947 = vmatpush1.msra.mxu0 0.0
    %948 = vmatprep.subr.mxu0 0.0
    %949 = vmatpush1.msra.mxu0 0.0
    %950 = vmatprep.subr.mxu0 0.0
    %951 = vmatpush1.msra.mxu0 0.0
    %952 = vmatprep.subr.mxu0 0.0
    %953 = vmatpush1.msra.mxu0 0.0
    %954 = vmatprep.subr.mxu0 0.0
    %955 = vmatpush1.msra.mxu0 0.0
    %956 = vmatprep.subr.mxu0 0.0
    %957 = vmatpush1.msra.mxu0 0.0
    %958 = vmatprep.subr.mxu0 0.0
    %959 = vmatpush1.msra.mxu0 %v922
    %960 = vmatprep.subr.mxu0 0.0
    %961 = vmatpush1.msra.mxu0 %v921
    %962 = vmatprep.subr.mxu0 0.0
    %963 = vmatpush1.msra.mxu0 %v920
    %964 = vmatprep.subr.mxu0 0.0
    %965 = vmatpush1.msra.mxu0 %v919
    %966 = vmatprep.subr.mxu0 0.0
    %967 = vmatpush2.msra.mxu0 0.0
    %968 = vmatprep.subr.mxu0 0.0
    %969 = vmatpush2.msra.mxu0 0.0
    %970 = vmatprep.subr.mxu0 0.0
    %971 = vmatpush2.msra.mxu0 0.0
    %972 = vmatprep.subr.mxu0 0.0
    %973 = vmatpush2.msra.mxu0 0.0
    %974 = vmatprep.subr.mxu0 0.0
    %975 = vmatpush2.msra.mxu0 0.0
    %976 = vmatprep.subr.mxu0 0.0
    %977 = vmatpush2.msra.mxu0 0.0
    %978 = vmatprep.subr.mxu0 0.0
    %979 = vmatpush2.msra.mxu0 0.0
    %980 = vmatprep.subr.mxu0 0.0
    %981 = vmatpush2.msra.mxu0 0.0
    %982 = vmatprep.subr.mxu0 0.0
    %983 = vmatpush2.msra.mxu0 0.0
    %984 = vmatprep.subr.mxu0 0.0
    %985 = vmatpush2.msra.mxu0 0.0
    %986 = vmatprep.subr.mxu0 0.0
    %987 = vmatpush2.msra.mxu0 0.0
    %988 = vmatprep.subr.mxu0 0.0
    %989 = vmatpush2.msra.mxu0 0.0
    %990 = vmatprep.subr.mxu0 0.0
    %991 = vmatpush2.msra.mxu0 0.0
    %992 = vmatprep.subr.mxu0 0.0
    %993 = vmatpush2.msra.mxu0 0.0
    %994 = vmatprep.subr.mxu0 0.0
    %995 = vmatpush2.msra.mxu0 0.0
    %996 = vmatprep.subr.mxu0 0.0
    %997 = vmatpush2.msra.mxu0 0.0
    %998 = vmatprep.mubr.f32.mxu0 0.0
    %999 = vmatmul.mubr.f32.gmra.mxu0 %v932
    %v1000 = vpop.f32.mrf.mxu0
    %v1001 = vadd.f32 %v929, %v1000
    %v1002 = vpop.f32.mrf.mxu0
    %1003 = vdwg.mxu0
    %s1004 = scalar_lea.vmem %s9, 24
    %1005 = vst [vmem:[%s1004] sm:$0xff] %v1001
    %s1006 = scalar_lea.vmem [#allocation10], 128
    %v1007 = vld [vmem:[%s1006] sm:$0xff]
    %v1008 = vld [vmem:[%s1006 + $0x8] sm:$0xff]
    %v1009 = vld [vmem:[%s1006 + $0x10] sm:$0xff]
    %v1010 = vld [vmem:[%s1006 + $0x18] sm:$0xff]
    %s1011 = scalar_lea.vmem %s6, 4
    %v1012 = vld [vmem:[%s1011] sm:$0x1]
    %v1014 = vlaneseq
    %v1015 = vshrl.u32 %v1014, 7
    %v1016 = vsub.s32 0, %v1015
    %v1017 = vrot.slane %v1012, %v1016
    %v1020 = vsel %vm318, %v306, 0
    %1022 = vmatprep.subr.mxu0 0.0
    %1023 = vmatpush1.msra.mxu0 0.0
    %1024 = vmatprep.subr.mxu0 0.0
    %1025 = vmatpush1.msra.mxu0 0.0
    %1026 = vmatprep.subr.mxu0 0.0
    %1027 = vmatpush1.msra.mxu0 0.0
    %1028 = vmatprep.subr.mxu0 0.0
    %1029 = vmatpush1.msra.mxu0 0.0
    %1030 = vmatprep.subr.mxu0 0.0
    %1031 = vmatpush1.msra.mxu0 0.0
    %1032 = vmatprep.subr.mxu0 0.0
    %1033 = vmatpush1.msra.mxu0 0.0
    %1034 = vmatprep.subr.mxu0 0.0
    %1035 = vmatpush1.msra.mxu0 0.0
    %1036 = vmatprep.subr.mxu0 0.0
    %1037 = vmatpush1.msra.mxu0 0.0
    %1038 = vmatprep.subr.mxu0 0.0
    %1039 = vmatpush1.msra.mxu0 0.0
    %1040 = vmatprep.subr.mxu0 0.0
    %1041 = vmatpush1.msra.mxu0 0.0
    %1042 = vmatprep.subr.mxu0 0.0
    %1043 = vmatpush1.msra.mxu0 0.0
    %1044 = vmatprep.subr.mxu0 0.0
    %1045 = vmatpush1.msra.mxu0 0.0
    %1046 = vmatprep.subr.mxu0 0.0
    %1047 = vmatpush1.msra.mxu0 %v1010
    %1048 = vmatprep.subr.mxu0 0.0
    %1049 = vmatpush1.msra.mxu0 %v1009
    %1050 = vmatprep.subr.mxu0 0.0
    %1051 = vmatpush1.msra.mxu0 %v1008
    %1052 = vmatprep.subr.mxu0 0.0
    %1053 = vmatpush1.msra.mxu0 %v1007
    %1054 = vmatprep.subr.mxu0 0.0
    %1055 = vmatpush2.msra.mxu0 0.0
    %1056 = vmatprep.subr.mxu0 0.0
    %1057 = vmatpush2.msra.mxu0 0.0
    %1058 = vmatprep.subr.mxu0 0.0
    %1059 = vmatpush2.msra.mxu0 0.0
    %1060 = vmatprep.subr.mxu0 0.0
    %1061 = vmatpush2.msra.mxu0 0.0
    %1062 = vmatprep.subr.mxu0 0.0
    %1063 = vmatpush2.msra.mxu0 0.0
    %1064 = vmatprep.subr.mxu0 0.0
    %1065 = vmatpush2.msra.mxu0 0.0
    %1066 = vmatprep.subr.mxu0 0.0
    %1067 = vmatpush2.msra.mxu0 0.0
    %1068 = vmatprep.subr.mxu0 0.0
    %1069 = vmatpush2.msra.mxu0 0.0
    %1070 = vmatprep.subr.mxu0 0.0
    %1071 = vmatpush2.msra.mxu0 0.0
    %1072 = vmatprep.subr.mxu0 0.0
    %1073 = vmatpush2.msra.mxu0 0.0
    %1074 = vmatprep.subr.mxu0 0.0
    %1075 = vmatpush2.msra.mxu0 0.0
    %1076 = vmatprep.subr.mxu0 0.0
    %1077 = vmatpush2.msra.mxu0 0.0
    %1078 = vmatprep.subr.mxu0 0.0
    %1079 = vmatpush2.msra.mxu0 0.0
    %1080 = vmatprep.subr.mxu0 0.0
    %1081 = vmatpush2.msra.mxu0 0.0
    %1082 = vmatprep.subr.mxu0 0.0
    %1083 = vmatpush2.msra.mxu0 0.0
    %1084 = vmatprep.subr.mxu0 0.0
    %1085 = vmatpush2.msra.mxu0 0.0
    %1086 = vmatprep.mubr.f32.mxu0 0.0
    %1087 = vmatmul.mubr.f32.gmra.mxu0 %v1020
    %v1088 = vpop.f32.mrf.mxu0
    %v1089 = vadd.f32 %v1017, %v1088
    %v1090 = vpop.f32.mrf.mxu0
    %1091 = vdwg.mxu0
    %v1092 = vmax.f32 %v1089, 0.0
    %s1093 = scalar_lea.vmem [#allocation12], 128
    %v1094 = vld [vmem:[%s1093] sm:$0xff]
    %v1095 = vld [vmem:[%s1093 + $0x8] sm:$0xff]
    %v1096 = vld [vmem:[%s1093 + $0x10] sm:$0xff]
    %v1097 = vld [vmem:[%s1093 + $0x18] sm:$0xff]
    %s1098 = scalar_lea.vmem [#allocation13], 4
    %v1099 = vld [vmem:[%s1098] sm:$0x1]
    %v1101 = vlaneseq
    %v1102 = vshrl.u32 %v1101, 7
    %v1103 = vsub.s32 0, %v1102
    %v1104 = vrot.slane %v1099, %v1103
    %v1107 = vsel %vm318, %v1092, 0
    %1109 = vmatprep.subr.mxu0 0.0
    %1110 = vmatpush1.msra.mxu0 0.0
    %1111 = vmatprep.subr.mxu0 0.0
    %1112 = vmatpush1.msra.mxu0 0.0
    %1113 = vmatprep.subr.mxu0 0.0
    %1114 = vmatpush1.msra.mxu0 0.0
    %1115 = vmatprep.subr.mxu0 0.0
    %1116 = vmatpush1.msra.mxu0 0.0
    %1117 = vmatprep.subr.mxu0 0.0
    %1118 = vmatpush1.msra.mxu0 0.0
    %1119 = vmatprep.subr.mxu0 0.0
    %1120 = vmatpush1.msra.mxu0 0.0
    %1121 = vmatprep.subr.mxu0 0.0
    %1122 = vmatpush1.msra.mxu0 0.0
    %1123 = vmatprep.subr.mxu0 0.0
    %1124 = vmatpush1.msra.mxu0 0.0
    %1125 = vmatprep.subr.mxu0 0.0
    %1126 = vmatpush1.msra.mxu0 0.0
    %1127 = vmatprep.subr.mxu0 0.0
    %1128 = vmatpush1.msra.mxu0 0.0
    %1129 = vmatprep.subr.mxu0 0.0
    %1130 = vmatpush1.msra.mxu0 0.0
    %1131 = vmatprep.subr.mxu0 0.0
    %1132 = vmatpush1.msra.mxu0 0.0
    %1133 = vmatprep.subr.mxu0 0.0
    %1134 = vmatpush1.msra.mxu0 %v1097
    %1135 = vmatprep.subr.mxu0 0.0
    %1136 = vmatpush1.msra.mxu0 %v1096
    %1137 = vmatprep.subr.mxu0 0.0
    %1138 = vmatpush1.msra.mxu0 %v1095
    %1139 = vmatprep.subr.mxu0 0.0
    %1140 = vmatpush1.msra.mxu0 %v1094
    %1141 = vmatprep.subr.mxu0 0.0
    %1142 = vmatpush2.msra.mxu0 0.0
    %1143 = vmatprep.subr.mxu0 0.0
    %1144 = vmatpush2.msra.mxu0 0.0
    %1145 = vmatprep.subr.mxu0 0.0
    %1146 = vmatpush2.msra.mxu0 0.0
    %1147 = vmatprep.subr.mxu0 0.0
    %1148 = vmatpush2.msra.mxu0 0.0
    %1149 = vmatprep.subr.mxu0 0.0
    %1150 = vmatpush2.msra.mxu0 0.0
    %1151 = vmatprep.subr.mxu0 0.0
    %1152 = vmatpush2.msra.mxu0 0.0
    %1153 = vmatprep.subr.mxu0 0.0
    %1154 = vmatpush2.msra.mxu0 0.0
    %1155 = vmatprep.subr.mxu0 0.0
    %1156 = vmatpush2.msra.mxu0 0.0
    %1157 = vmatprep.subr.mxu0 0.0
    %1158 = vmatpush2.msra.mxu0 0.0
    %1159 = vmatprep.subr.mxu0 0.0
    %1160 = vmatpush2.msra.mxu0 0.0
    %1161 = vmatprep.subr.mxu0 0.0
    %1162 = vmatpush2.msra.mxu0 0.0
    %1163 = vmatprep.subr.mxu0 0.0
    %1164 = vmatpush2.msra.mxu0 0.0
    %1165 = vmatprep.subr.mxu0 0.0
    %1166 = vmatpush2.msra.mxu0 0.0
    %1167 = vmatprep.subr.mxu0 0.0
    %1168 = vmatpush2.msra.mxu0 0.0
    %1169 = vmatprep.subr.mxu0 0.0
    %1170 = vmatpush2.msra.mxu0 0.0
    %1171 = vmatprep.subr.mxu0 0.0
    %1172 = vmatpush2.msra.mxu0 0.0
    %1173 = vmatprep.mubr.f32.mxu0 0.0
    %1174 = vmatmul.mubr.f32.gmra.mxu0 %v1107
    %v1175 = vpop.f32.mrf.mxu0
    %v1176 = vadd.f32 %v1104, %v1175
    %v1177 = vpop.f32.mrf.mxu0
    %1178 = vdwg.mxu0
    %s1179 = scalar_lea.vmem %s9, 32
    %1180 = vst [vmem:[%s1179] sm:$0xff] %v1176
    // Predicated region
    $region70: #{ensemble_dynamics_forward.1} parent=1 // pred_check
      _
    $region71: #{ensemble_dynamics_forward.1} parent=1 // pred_check_branch
      %1182 = sbr.rel (0) target = $region73
    $region72: #{ensemble_dynamics_forward.1} parent=1 // pred_region
      _
    $region73: #{ensemble_dynamics_forward.1} parent=1 // pred_fallthru
      _
    // Predicated region
    $region74: #{ensemble_dynamics_forward.1} parent=1 // pred_check
      _
    $region75: #{ensemble_dynamics_forward.1} parent=1 // pred_check_branch
      %1184 = sbr.rel (0) target = $region77
    $region76: #{ensemble_dynamics_forward.1} parent=1 // pred_region
      _
    $region77: #{ensemble_dynamics_forward.1} parent=1 // pred_fallthru
      _
    %1185 = vsyncpa [#allocation3], 1
    %1186 = vsyncpa [#allocation5], 1
    %1187 = vsyncpa [#allocation8], 1
    %1188 = vsyncpa [#allocation11], 1
    %1189 = vsyncpa [#allocation14], 1

</llo_original>
